<compile_context>
chip_gen: v7x
topology: tpu7x:2x2x1
jax: 0.10.0
libtpu: 0.0.40
codegen_flags: <defaults>
</compile_context>

<pallas_src>
import math
import numpy as np
import jax
import jax.numpy as jnp
from jax.experimental import pallas as pl
from jax.experimental.pallas import tpu as pltpu

# ----------------- synthetic "args" / sizes -----------------
B = 2          # batch
N = 16         # number of nodes / atoms
IN_F = 8       # in_features
OUT_F = 16     # out_features
E_OUT = 8      # args.gat_e_out_dim
BONDS_IN = 4   # args.gat_bonds_input_dim
BONDS_OUT = 8  # args.gat_bonds_out_dim
L1_OUT = 16    # args.gat_layer1_out_dim

NEG_INF = -9000000000000000.0
LEAKY_SLOPE = 0.01  # nn.LeakyReLU default


# ----------------- fused Pallas kernel (one batch element per grid step) -----------------
def _gat_fused_kernel(
    x_ref,        # (1, N, IN_F)
    adj_ref,      # (1, N, N)
    bwt_ref,      # (1, BONDS_IN, N*N)   bond weights, edge axis on lanes
    w_ref,        # (IN_F, OUT_F)
    a1t_ref,      # (E_OUT, OUT_F)       a[:OUT_F]^T
    a2t_ref,      # (E_OUT, OUT_F)       a[OUT_F:]^T
    sel1t_ref,    # (N, N*N)             one-hot: first-half node index per edge
    sel2t_ref,    # (N, N*N)             one-hot: second-half node index per edge
    rsel_ref,     # (N, N*N)             one-hot: k // N == i
    csel_ref,     # (N*N, N)             one-hot: k %  N == j
    wfcwt_ref,    # (BONDS_OUT, BONDS_IN)
    wfcbt_ref,    # (BONDS_OUT, 1)
    fcet_ref,     # (1, E_OUT)           fc weight, e half
    fcbt_ref,     # (1, BONDS_OUT)       fc weight, bond half
    fcb_ref,      # (1, 1)               fc bias scalar (SMEM)
    fcow_ref,     # (OUT_F, L1_OUT)
    fcob_ref,     # (1, L1_OUT)
    o_ref,        # (1, N, L1_OUT)
):
    f32 = jnp.float32
    xb = x_ref[0]                                   # (N, IN_F)
    adj = adj_ref[0]                                # (N, N)
    bwt = bwt_ref[0]                                # (BONDS_IN, N*N)

    # atom features: (N, OUT_F)
    af = jnp.dot(xb, w_ref[...], preferred_element_type=f32)

    # per-node projections, transposed: e{1,2}t[c, r] = sum_m a{1,2}[m, c] * af[r, m]
    # (A @ B^T form — contract both operands on their last dim)
    dn = (((1,), (1,)), ((), ()))
    e1t = jax.lax.dot_general(a1t_ref[...], af, dn, preferred_element_type=f32)  # (E_OUT, N)
    e2t = jax.lax.dot_general(a2t_ref[...], af, dn, preferred_element_type=f32)  # (E_OUT, N)

    # scatter to the N*N edges (lane axis), reproducing torch's cat(dim=1).view layout
    e_t = (jnp.dot(e1t, sel1t_ref[...], preferred_element_type=f32)
           + jnp.dot(e2t, sel2t_ref[...], preferred_element_type=f32))           # (E_OUT, N*N)

    # bond-weight projection: K=BONDS_IN unrolled outer-product FMAs (VPU), bias as init
    wfcw = wfcwt_ref[...]                           # (BONDS_OUT, BONDS_IN)
    wp_t = wfcbt_ref[...]                           # (BONDS_OUT, 1) -> broadcasts
    for d in range(BONDS_IN):
        wp_t = wp_t + wfcw[:, d:d + 1] * bwt[d:d + 1, :]                          # (BONDS_OUT, N*N)

    # LeakyReLU(cat(e, wp)) == cat(LeakyReLU(e), LeakyReLU(wp)) — elementwise
    e_t = jnp.where(e_t > 0, e_t, LEAKY_SLOPE * e_t)
    wp_t = jnp.where(wp_t > 0, wp_t, LEAKY_SLOPE * wp_t)

    # edge logits, lane-dense (1, N*N); fc weight split into the e / bond halves
    z = (jnp.dot(fcet_ref[...], e_t, preferred_element_type=f32)
         + jnp.dot(fcbt_ref[...], wp_t, preferred_element_type=f32)
         + fcb_ref[0, 0])                                                         # (1, N*N)

    # relayout (1, N*N) -> (N, N): logits[i, j] = z[0, i*N + j] via one-hot selectors
    logits = jnp.dot(rsel_ref[...] * z, csel_ref[...], preferred_element_type=f32)  # (N, N)

    # masked softmax over dim j
    masked = jnp.where(adj > 0, logits, NEG_INF)
    m = jnp.max(masked, axis=-1, keepdims=True)
    p_exp = jnp.exp(masked - m)
    att = p_exp * pl.reciprocal(jnp.sum(p_exp, axis=-1, keepdims=True), approx=True)

    # aggregate + output projection + ELU (concat=True)
    h1 = jnp.dot(att, af, preferred_element_type=f32)                             # (N, OUT_F)
    hn = jnp.dot(h1, fcow_ref[...], preferred_element_type=f32) + fcob_ref[...]   # (N, L1_OUT)
    o_ref[0] = jnp.where(hn > 0, hn, jnp.exp(hn) - 1.0)


# ----------------- static constants reproducing torch's cat(dim=1).view layout -----------------
def _build_edge_index_constants():
    # torch: cat([h.repeat(1,1,N).view(B, N*N, -1), h.repeat(1,N,1)], dim=1).view(B, N, N, 2*F)
    # The flat buffer (2*N*N rows of OUT_F) gives, for edge k = i*N + j:
    #   first  half <- flat row 2k,   second half <- flat row 2k+1
    rows = np.arange(N)
    part1 = np.repeat(rows, N)                    # flat row k of repeat(1,1,N).view -> af[k // N]
    part2 = np.tile(rows, N)                      # flat row k of repeat(1,N,1)      -> af[k %  N]
    flat = np.concatenate([part1, part2]).reshape(N * N, 2)
    idx1, idx2 = flat[:, 0], flat[:, 1]

    ar = np.arange(N * N)
    sel1_t = np.zeros((N, N * N), np.float32)
    sel1_t[idx1, ar] = 1.0
    sel2_t = np.zeros((N, N * N), np.float32)
    sel2_t[idx2, ar] = 1.0
    rsel = (ar[None, :] // N == rows[:, None]).astype(np.float32)   # (N, N*N)
    csel = (ar[:, None] % N == rows[None, :]).astype(np.float32)    # (N*N, N)
    return (jnp.asarray(sel1_t), jnp.asarray(sel2_t),
            jnp.asarray(rsel), jnp.asarray(csel))


# ----------------- wrapper -----------------
def gat_layer_and_weight_forward(x, adj, bond_w, params):
    W, a_p, wfc_w, wfc_b, fc_w, fc_b, fco_w, fco_b = params
    sel1_t, sel2_t, rsel, csel = _build_edge_index_constants()

    # tiny parameter re-layouts (pure constant folding under jit)
    a1_t = a_p[:OUT_F].T                      # (E_OUT, OUT_F)
    a2_t = a_p[OUT_F:].T                      # (E_OUT, OUT_F)
    wfcw_t = wfc_w.T                          # (BONDS_OUT, BONDS_IN)
    wfcb_t = wfc_b.reshape(BONDS_OUT, 1)      # (BONDS_OUT, 1)
    fce_t = fc_w[:E_OUT].T                    # (1, E_OUT)
    fcb_t = fc_w[E_OUT:].T                    # (1, BONDS_OUT)
    fc_b_s = fc_b.reshape(1, 1)               # (1, 1) scalar -> SMEM

    # bond weights with the edge axis (N*N) on lanes
    bw_t = jnp.transpose(bond_w.reshape(B, N * N, BONDS_IN), (0, 2, 1))  # (B, BONDS_IN, N*N)

    def param_spec(shape):
        return pl.BlockSpec(shape, lambda b: (0, 0))

    out = pl.pallas_call(
        _gat_fused_kernel,
        out_shape=jax.ShapeDtypeStruct((B, N, L1_OUT), jnp.float32),
        grid_spec=pltpu.PrefetchScalarGridSpec(
            num_scalar_prefetch=0,
            grid=(B,),
            in_specs=[
                pl.BlockSpec((1, N, IN_F), lambda b: (b, 0, 0)),           # x
                pl.BlockSpec((1, N, N), lambda b: (b, 0, 0)),              # adj
                pl.BlockSpec((1, BONDS_IN, N * N), lambda b: (b, 0, 0)),   # bond weights^T
                param_spec((IN_F, OUT_F)),                                 # W
                param_spec((E_OUT, OUT_F)),                                # a[:OUT_F]^T
                param_spec((E_OUT, OUT_F)),                                # a[OUT_F:]^T
                param_spec((N, N * N)),                                    # sel1^T
                param_spec((N, N * N)),                                    # sel2^T
                param_spec((N, N * N)),                                    # row selector
                param_spec((N * N, N)),                                    # col selector
                param_spec((BONDS_OUT, BONDS_IN)),                         # weight_fc W^T
                param_spec((BONDS_OUT, 1)),                                # weight_fc b^T
                param_spec((1, E_OUT)),                                    # fc W (e half)^T
                param_spec((1, BONDS_OUT)),                                # fc W (bond half)^T
                pl.BlockSpec(memory_space=pltpu.MemorySpace.SMEM),         # fc bias scalar
                param_spec((OUT_F, L1_OUT)),                               # fc_out W
                param_spec((1, L1_OUT)),                                   # fc_out b
            ],
            out_specs=pl.BlockSpec((1, N, L1_OUT), lambda b: (b, 0, 0)),
        ),
        compiler_params=pltpu.CompilerParams(dimension_semantics=("parallel",)),
    )(x, adj, bw_t, W, a1_t, a2_t, sel1_t, sel2_t, rsel, csel,
      wfcw_t, wfcb_t, fce_t, fcb_t, fc_b_s, fco_w, fco_b)
    return out


# ----------------- pure-JAX reference (mirrors torch forward exactly) -----------------
def reference_forward(x, adj, bond_w, params):
    W, a_p, wfc_w, wfc_b, fc_w, fc_b, fco_w, fco_b = params
    af = jnp.matmul(x, W, precision=jax.lax.Precision.HIGHEST)
    part1 = jnp.tile(af, (1, 1, N)).reshape(B, N * N, OUT_F)
    part2 = jnp.tile(af, (1, N, 1))
    at = jnp.concatenate([part1, part2], axis=1).reshape(B, N, N, 2 * OUT_F)
    e = jnp.matmul(at, a_p, precision=jax.lax.Precision.HIGHEST)
    wp = jnp.matmul(bond_w, wfc_w, precision=jax.lax.Precision.HIGHEST) + wfc_b[0]
    e = jnp.concatenate([e, wp], axis=3)
    e = jnp.where(e > 0, e, LEAKY_SLOPE * e)
    e = (jnp.matmul(e, fc_w, precision=jax.lax.Precision.HIGHEST) + fc_b[0])[..., 0]
    masked = jnp.where(adj > 0, e, NEG_INF)
    att = jax.nn.softmax(masked, axis=2)
    h1 = jnp.matmul(att, af, precision=jax.lax.Precision.HIGHEST)
    hn = jnp.matmul(h1, fco_w, precision=jax.lax.Precision.HIGHEST) + fco_b[0]
    return jnp.where(hn > 0, hn, jnp.exp(hn) - 1.0)


# ----------------- deterministic parameter init -----------------
def _xavier_uniform(key, shape, gain=1.414):
    fan_in, fan_out = shape
    bound = gain * math.sqrt(6.0 / (fan_in + fan_out))
    return jax.random.uniform(key, shape, jnp.float32, -bound, bound)


def _linear(key, fan_in, fan_out):
    kw, kb = jax.random.split(key)
    bound = 1.0 / math.sqrt(fan_in)
    w = jax.random.uniform(kw, (fan_in, fan_out), jnp.float32, -bound, bound)  # stored as (in, out)
    b = jax.random.uniform(kb, (1, fan_out), jnp.float32, -bound, bound)
    return w, b


if __name__ == "__main__":
    key = jax.random.PRNGKey(0)
    ks = jax.random.split(key, 8)

    W = _xavier_uniform(ks[0], (IN_F, OUT_F))                 # self.W
    a_p = _xavier_uniform(ks[1], (2 * OUT_F, E_OUT))          # self.a
    wfc_w, wfc_b = _linear(ks[2], BONDS_IN, BONDS_OUT)        # self.weight_fc
    fc_w, fc_b = _linear(ks[3], E_OUT + BONDS_OUT, 1)         # self.fc
    fco_w, fco_b = _linear(ks[4], OUT_F, L1_OUT)              # self.fc_out
    params = (W, a_p, wfc_w, wfc_b, fc_w, fc_b, fco_w, fco_b)

    x = jax.random.normal(ks[5], (B, N, IN_F), jnp.float32)
    adj_rand = (jax.random.uniform(ks[6], (B, N, N)) > 0.5).astype(jnp.float32)
    adj = jnp.maximum(adj_rand, jnp.eye(N, dtype=jnp.float32)[None])   # keep self-loops
    bond_w = jax.random.normal(ks[7], (B, N, N, BONDS_IN), jnp.float32)

    fwd = jax.jit(gat_layer_and_weight_forward)
    out = jax.block_until_ready(fwd(x, adj, bond_w, params))

    ref = jax.block_until_ready(reference_forward(x, adj, bond_w, params))
    # 2e-2 tolerance: covers MXU f32 passes + the EUP approximate reciprocal in the softmax.
    if not np.allclose(np.asarray(out), np.asarray(ref), atol=2e-2, rtol=2e-2):
        raise AssertionError("Pallas output does not match pure-JAX reference")

    print("KERNEL_OK")
</pallas_src>

<mosaic_0001>
module attributes {stable_mosaic.version = 11 : i64} {
  func.func @_gat_fused_kernel(%arg0: i32, %arg1: memref<1x16x8xf32, #tpu.memory_space<vmem>>, %arg2: memref<1x16x16xf32, #tpu.memory_space<vmem>>, %arg3: memref<1x4x256xf32, #tpu.memory_space<vmem>>, %arg4: memref<8x16xf32, #tpu.memory_space<vmem>>, %arg5: memref<8x16xf32, #tpu.memory_space<vmem>>, %arg6: memref<8x16xf32, #tpu.memory_space<vmem>>, %arg7: memref<16x256xf32, #tpu.memory_space<vmem>>, %arg8: memref<16x256xf32, #tpu.memory_space<vmem>>, %arg9: memref<16x256xf32, #tpu.memory_space<vmem>>, %arg10: memref<256x16xf32, #tpu.memory_space<vmem>>, %arg11: memref<8x4xf32, #tpu.memory_space<vmem>>, %arg12: memref<8x1xf32, #tpu.memory_space<vmem>>, %arg13: memref<1x8xf32, #tpu.memory_space<vmem>>, %arg14: memref<1x8xf32, #tpu.memory_space<vmem>>, %arg15: memref<1x1xf32, #tpu.memory_space<smem>>, %arg16: memref<16x16xf32, #tpu.memory_space<vmem>>, %arg17: memref<1x16xf32, #tpu.memory_space<vmem>>, %arg18: memref<1x16x16xf32, #tpu.memory_space<vmem>>) attributes {dimension_semantics = [#tpu.dimension_semantics<parallel>], iteration_bounds = array<i64: 2>, scalar_prefetch = 0 : i64, scratch_operands = 0 : i64, tpu.core_type = #tpu.core_type<tc>, window_params = [{transform_indices = @transform_0, window_bounds = array<i64: 1, 16, 8>}, {transform_indices = @transform_1, window_bounds = array<i64: 1, 16, 16>}, {transform_indices = @transform_2, window_bounds = array<i64: 1, 4, 256>}, {pipeline_mode = #tpu.pipeline_mode<synchronous>, transform_indices = @transform_3, window_bounds = array<i64: 8, 16>}, {pipeline_mode = #tpu.pipeline_mode<synchronous>, transform_indices = @transform_4, window_bounds = array<i64: 8, 16>}, {pipeline_mode = #tpu.pipeline_mode<synchronous>, transform_indices = @transform_5, window_bounds = array<i64: 8, 16>}, {pipeline_mode = #tpu.pipeline_mode<synchronous>, transform_indices = @transform_6, window_bounds = array<i64: 16, 256>}, {pipeline_mode = #tpu.pipeline_mode<synchronous>, transform_indices = @transform_7, window_bounds = array<i64: 16, 256>}, {pipeline_mode = #tpu.pipeline_mode<synchronous>, transform_indices = @transform_8, window_bounds = array<i64: 16, 256>}, {pipeline_mode = #tpu.pipeline_mode<synchronous>, transform_indices = @transform_9, window_bounds = array<i64: 256, 16>}, {pipeline_mode = #tpu.pipeline_mode<synchronous>, transform_indices = @transform_10, window_bounds = array<i64: 8, 4>}, {pipeline_mode = #tpu.pipeline_mode<synchronous>, transform_indices = @transform_11, window_bounds = array<i64: 8, 1>}, {pipeline_mode = #tpu.pipeline_mode<synchronous>, transform_indices = @transform_12, window_bounds = array<i64: 1, 8>}, {pipeline_mode = #tpu.pipeline_mode<synchronous>, transform_indices = @transform_13, window_bounds = array<i64: 1, 8>}, {transform_indices = @transform_14, window_bounds = array<i64: 1, 1>}, {pipeline_mode = #tpu.pipeline_mode<synchronous>, transform_indices = @transform_15, window_bounds = array<i64: 16, 16>}, {pipeline_mode = #tpu.pipeline_mode<synchronous>, transform_indices = @transform_16, window_bounds = array<i64: 1, 16>}, {transform_indices = @transform_17, window_bounds = array<i64: 1, 16, 16>}]} {
    %c0 = arith.constant 0 : index
    %c0_0 = arith.constant 0 : index
    %c0_1 = arith.constant 0 : index
    %0 = vector.load %arg1[%c0, %c0_0, %c0_1] : memref<1x16x8xf32, #tpu.memory_space<vmem>>, vector<1x16x8xf32>
    %1 = vector.shape_cast %0 : vector<1x16x8xf32> to vector<16x8xf32>
    %c0_2 = arith.constant 0 : index
    %c0_3 = arith.constant 0 : index
    %c0_4 = arith.constant 0 : index
    %2 = vector.load %arg2[%c0_2, %c0_3, %c0_4] : memref<1x16x16xf32, #tpu.memory_space<vmem>>, vector<1x16x16xf32>
    %3 = vector.shape_cast %2 : vector<1x16x16xf32> to vector<16x16xf32>
    %c0_5 = arith.constant 0 : index
    %c0_6 = arith.constant 0 : index
    %c0_7 = arith.constant 0 : index
    %4 = vector.load %arg3[%c0_5, %c0_6, %c0_7] : memref<1x4x256xf32, #tpu.memory_space<vmem>>, vector<1x4x256xf32>
    %5 = vector.shape_cast %4 : vector<1x4x256xf32> to vector<4x256xf32>
    %c0_8 = arith.constant 0 : index
    %c0_9 = arith.constant 0 : index
    %6 = vector.load %arg4[%c0_8, %c0_9] : memref<8x16xf32, #tpu.memory_space<vmem>>, vector<8x16xf32>
    %cst = arith.constant dense<0.000000e+00> : vector<16x16xf32>
    %7 = tpu.matmul %1, %6, %cst {dimension_numbers = #tpu.dot_dimension_numbers<[1], [0], [0], [1], [0, 0, 1, 1], [], []>} : vector<16x8xf32>, vector<8x16xf32>, vector<16x16xf32> -> vector<16x16xf32>
    %c0_10 = arith.constant 0 : index
    %c0_11 = arith.constant 0 : index
    %8 = vector.load %arg5[%c0_10, %c0_11] : memref<8x16xf32, #tpu.memory_space<vmem>>, vector<8x16xf32>
    %cst_12 = arith.constant dense<0.000000e+00> : vector<8x16xf32>
    %9 = tpu.matmul %8, %7, %cst_12 {dimension_numbers = #tpu.dot_dimension_numbers<[1], [1], [0], [0], [0, 0, 1, 0], [], []>} : vector<8x16xf32>, vector<16x16xf32>, vector<8x16xf32> -> vector<8x16xf32>
    %c0_13 = arith.constant 0 : index
    %c0_14 = arith.constant 0 : index
    %10 = vector.load %arg6[%c0_13, %c0_14] : memref<8x16xf32, #tpu.memory_space<vmem>>, vector<8x16xf32>
    %cst_15 = arith.constant dense<0.000000e+00> : vector<8x16xf32>
    %11 = tpu.matmul %10, %7, %cst_15 {dimension_numbers = #tpu.dot_dimension_numbers<[1], [1], [0], [0], [0, 0, 1, 0], [], []>} : vector<8x16xf32>, vector<16x16xf32>, vector<8x16xf32> -> vector<8x16xf32>
    %c0_16 = arith.constant 0 : index
    %c0_17 = arith.constant 0 : index
    %12 = vector.load %arg7[%c0_16, %c0_17] : memref<16x256xf32, #tpu.memory_space<vmem>>, vector<16x256xf32>
    %cst_18 = arith.constant dense<0.000000e+00> : vector<8x256xf32>
    %13 = tpu.matmul %9, %12, %cst_18 {dimension_numbers = #tpu.dot_dimension_numbers<[1], [0], [0], [1], [0, 0, 1, 1], [], []>} : vector<8x16xf32>, vector<16x256xf32>, vector<8x256xf32> -> vector<8x256xf32>
    %c0_19 = arith.constant 0 : index
    %c0_20 = arith.constant 0 : index
    %14 = vector.load %arg8[%c0_19, %c0_20] : memref<16x256xf32, #tpu.memory_space<vmem>>, vector<16x256xf32>
    %cst_21 = arith.constant dense<0.000000e+00> : vector<8x256xf32>
    %15 = tpu.matmul %11, %14, %cst_21 {dimension_numbers = #tpu.dot_dimension_numbers<[1], [0], [0], [1], [0, 0, 1, 1], [], []>} : vector<8x16xf32>, vector<16x256xf32>, vector<8x256xf32> -> vector<8x256xf32>
    %16 = arith.addf %13, %15 : vector<8x256xf32>
    %c0_22 = arith.constant 0 : index
    %c0_23 = arith.constant 0 : index
    %17 = vector.load %arg11[%c0_22, %c0_23] : memref<8x4xf32, #tpu.memory_space<vmem>>, vector<8x4xf32>
    %c0_24 = arith.constant 0 : index
    %c0_25 = arith.constant 0 : index
    %18 = vector.load %arg12[%c0_24, %c0_25] : memref<8x1xf32, #tpu.memory_space<vmem>>, vector<8x1xf32>
    %19 = vector.extract_strided_slice %17 {offsets = [0, 0], sizes = [8, 1], strides = [1, 1]} : vector<8x4xf32> to vector<8x1xf32>
    %20 = vector.extract_strided_slice %5 {offsets = [0, 0], sizes = [1, 256], strides = [1, 1]} : vector<4x256xf32> to vector<1x256xf32>
    %21 = vector.broadcast %19 : vector<8x1xf32> to vector<8x256xf32>
    %22 = vector.broadcast %20 : vector<1x256xf32> to vector<8x256xf32>
    %23 = arith.mulf %21, %22 : vector<8x256xf32>
    %24 = vector.broadcast %18 : vector<8x1xf32> to vector<8x256xf32>
    %25 = arith.addf %24, %23 : vector<8x256xf32>
    %26 = vector.extract_strided_slice %17 {offsets = [0, 1], sizes = [8, 1], strides = [1, 1]} : vector<8x4xf32> to vector<8x1xf32>
    %27 = vector.extract_strided_slice %5 {offsets = [1, 0], sizes = [1, 256], strides = [1, 1]} : vector<4x256xf32> to vector<1x256xf32>
    %28 = vector.broadcast %26 : vector<8x1xf32> to vector<8x256xf32>
    %29 = vector.broadcast %27 : vector<1x256xf32> to vector<8x256xf32>
    %30 = arith.mulf %28, %29 : vector<8x256xf32>
    %31 = arith.addf %25, %30 : vector<8x256xf32>
    %32 = vector.extract_strided_slice %17 {offsets = [0, 2], sizes = [8, 1], strides = [1, 1]} : vector<8x4xf32> to vector<8x1xf32>
    %33 = vector.extract_strided_slice %5 {offsets = [2, 0], sizes = [1, 256], strides = [1, 1]} : vector<4x256xf32> to vector<1x256xf32>
    %34 = vector.broadcast %32 : vector<8x1xf32> to vector<8x256xf32>
    %35 = vector.broadcast %33 : vector<1x256xf32> to vector<8x256xf32>
    %36 = arith.mulf %34, %35 : vector<8x256xf32>
    %37 = arith.addf %31, %36 : vector<8x256xf32>
    %38 = vector.extract_strided_slice %17 {offsets = [0, 3], sizes = [8, 1], strides = [1, 1]} : vector<8x4xf32> to vector<8x1xf32>
    %39 = vector.extract_strided_slice %5 {offsets = [3, 0], sizes = [1, 256], strides = [1, 1]} : vector<4x256xf32> to vector<1x256xf32>
    %40 = vector.broadcast %38 : vector<8x1xf32> to vector<8x256xf32>
    %41 = vector.broadcast %39 : vector<1x256xf32> to vector<8x256xf32>
    %42 = arith.mulf %40, %41 : vector<8x256xf32>
    %43 = arith.addf %37, %42 : vector<8x256xf32>
    %cst_26 = arith.constant 0.000000e+00 : f32
    %44 = vector.broadcast %cst_26 : f32 to vector<8x256xf32>
    %45 = arith.cmpf ogt, %16, %44 : vector<8x256xf32>
    %cst_27 = arith.constant 0.00999999977 : f32
    %46 = vector.broadcast %cst_27 : f32 to vector<8x256xf32>
    %47 = arith.mulf %46, %16 : vector<8x256xf32>
    %48 = arith.select %45, %16, %47 : vector<8x256xi1>, vector<8x256xf32>
    %cst_28 = arith.constant 0.000000e+00 : f32
    %49 = vector.broadcast %cst_28 : f32 to vector<8x256xf32>
    %50 = arith.cmpf ogt, %43, %49 : vector<8x256xf32>
    %cst_29 = arith.constant 0.00999999977 : f32
    %51 = vector.broadcast %cst_29 : f32 to vector<8x256xf32>
    %52 = arith.mulf %51, %43 : vector<8x256xf32>
    %53 = arith.select %50, %43, %52 : vector<8x256xi1>, vector<8x256xf32>
    %c0_30 = arith.constant 0 : index
    %c0_31 = arith.constant 0 : index
    %54 = vector.load %arg13[%c0_30, %c0_31] : memref<1x8xf32, #tpu.memory_space<vmem>>, vector<1x8xf32>
    %cst_32 = arith.constant dense<0.000000e+00> : vector<1x256xf32>
    %55 = tpu.matmul %54, %48, %cst_32 {dimension_numbers = #tpu.dot_dimension_numbers<[1], [0], [0], [1], [0, 0, 1, 1], [], []>} : vector<1x8xf32>, vector<8x256xf32>, vector<1x256xf32> -> vector<1x256xf32>
    %c0_33 = arith.constant 0 : index
    %c0_34 = arith.constant 0 : index
    %56 = vector.load %arg14[%c0_33, %c0_34] : memref<1x8xf32, #tpu.memory_space<vmem>>, vector<1x8xf32>
    %cst_35 = arith.constant dense<0.000000e+00> : vector<1x256xf32>
    %57 = tpu.matmul %56, %53, %cst_35 {dimension_numbers = #tpu.dot_dimension_numbers<[1], [0], [0], [1], [0, 0, 1, 1], [], []>} : vector<1x8xf32>, vector<8x256xf32>, vector<1x256xf32> -> vector<1x256xf32>
    %58 = arith.addf %55, %57 : vector<1x256xf32>
    %c0_36 = arith.constant 0 : index
    %c0_37 = arith.constant 0 : index
    %59 = memref.load %arg15[%c0_36, %c0_37] : memref<1x1xf32, #tpu.memory_space<smem>>
    %60 = vector.broadcast %59 : f32 to vector<1x256xf32>
    %61 = arith.addf %58, %60 : vector<1x256xf32>
    %c0_38 = arith.constant 0 : index
    %c0_39 = arith.constant 0 : index
    %62 = vector.load %arg9[%c0_38, %c0_39] : memref<16x256xf32, #tpu.memory_space<vmem>>, vector<16x256xf32>
    %63 = vector.broadcast %61 : vector<1x256xf32> to vector<16x256xf32>
    %64 = arith.mulf %62, %63 : vector<16x256xf32>
    %c0_40 = arith.constant 0 : index
    %c0_41 = arith.constant 0 : index
    %65 = vector.load %arg10[%c0_40, %c0_41] : memref<256x16xf32, #tpu.memory_space<vmem>>, vector<256x16xf32>
    %cst_42 = arith.constant dense<0.000000e+00> : vector<16x16xf32>
    %66 = tpu.matmul %64, %65, %cst_42 {dimension_numbers = #tpu.dot_dimension_numbers<[1], [0], [0], [1], [0, 0, 1, 1], [], []>} : vector<16x256xf32>, vector<256x16xf32>, vector<16x16xf32> -> vector<16x16xf32>
    %cst_43 = arith.constant 0.000000e+00 : f32
    %67 = vector.broadcast %cst_43 : f32 to vector<16x16xf32>
    %68 = arith.cmpf ogt, %3, %67 : vector<16x16xf32>
    %cst_44 = arith.constant -9.000000e+15 : f32
    %69 = vector.broadcast %cst_44 : f32 to vector<16x16xf32>
    %70 = arith.select %68, %66, %69 : vector<16x16xi1>, vector<16x16xf32>
    %cst_45 = arith.constant dense<0xFF800000> : vector<16xf32>
    %71 = vector.multi_reduction <maximumf>, %70, %cst_45 [1] : vector<16x16xf32> to vector<16xf32>
    %72 = vector.shape_cast %71 : vector<16xf32> to vector<16x1xf32>
    %73 = vector.broadcast %72 : vector<16x1xf32> to vector<16x16xf32>
    %74 = arith.subf %70, %73 : vector<16x16xf32>
    %75 = math.exp %74 : vector<16x16xf32>
    %cst_46 = arith.constant dense<0.000000e+00> : vector<16xf32>
    %76 = vector.multi_reduction <add>, %75, %cst_46 [1] : vector<16x16xf32> to vector<16xf32>
    %77 = vector.shape_cast %76 : vector<16xf32> to vector<16x1xf32>
    %78 = tpu.reciprocal %77 {approx = true} : vector<16x1xf32> -> vector<16x1xf32>
    %79 = vector.broadcast %78 : vector<16x1xf32> to vector<16x16xf32>
    %80 = arith.mulf %75, %79 : vector<16x16xf32>
    %cst_47 = arith.constant dense<0.000000e+00> : vector<16x16xf32>
    %81 = tpu.matmul %80, %7, %cst_47 {dimension_numbers = #tpu.dot_dimension_numbers<[1], [0], [0], [1], [0, 0, 1, 1], [], []>} : vector<16x16xf32>, vector<16x16xf32>, vector<16x16xf32> -> vector<16x16xf32>
    %c0_48 = arith.constant 0 : index
    %c0_49 = arith.constant 0 : index
    %82 = vector.load %arg16[%c0_48, %c0_49] : memref<16x16xf32, #tpu.memory_space<vmem>>, vector<16x16xf32>
    %cst_50 = arith.constant dense<0.000000e+00> : vector<16x16xf32>
    %83 = tpu.matmul %81, %82, %cst_50 {dimension_numbers = #tpu.dot_dimension_numbers<[1], [0], [0], [1], [0, 0, 1, 1], [], []>} : vector<16x16xf32>, vector<16x16xf32>, vector<16x16xf32> -> vector<16x16xf32>
    %c0_51 = arith.constant 0 : index
    %c0_52 = arith.constant 0 : index
    %84 = vector.load %arg17[%c0_51, %c0_52] : memref<1x16xf32, #tpu.memory_space<vmem>>, vector<1x16xf32>
    %85 = vector.broadcast %84 : vector<1x16xf32> to vector<16x16xf32>
    %86 = arith.addf %83, %85 : vector<16x16xf32>
    %cst_53 = arith.constant 0.000000e+00 : f32
    %87 = vector.broadcast %cst_53 : f32 to vector<16x16xf32>
    %88 = arith.cmpf ogt, %86, %87 : vector<16x16xf32>
    %89 = math.exp %86 : vector<16x16xf32>
    %cst_54 = arith.constant 1.000000e+00 : f32
    %90 = vector.broadcast %cst_54 : f32 to vector<16x16xf32>
    %91 = arith.subf %89, %90 : vector<16x16xf32>
    %92 = arith.select %88, %86, %91 : vector<16x16xi1>, vector<16x16xf32>
    %c0_55 = arith.constant 0 : index
    %c0_56 = arith.constant 0 : index
    %c0_57 = arith.constant 0 : index
    %93 = vector.load %arg18[%c0_55, %c0_56, %c0_57] : memref<1x16x16xf32, #tpu.memory_space<vmem>>, vector<1x16x16xf32>
    %94 = vector.shape_cast %93 : vector<1x16x16xf32> to vector<16x16xf32>
    %95 = vector.shape_cast %92 : vector<16x16xf32> to vector<1x16x16xf32>
    tpu.vector_store %arg18[%c0_55, %c0_56, %c0_57], %95 {strides = array<i32>} : memref<1x16x16xf32, #tpu.memory_space<vmem>>, vector<1x16x16xf32>,
    return
  }
  func.func @transform_0(%arg0: i32) -> (i32, i32, i32) {
    %c0_i32 = arith.constant 0 : i32
    %c0_i32_0 = arith.constant 0 : i32
    %c0_i32_1 = arith.constant 0 : i32
    return %arg0, %c0_i32, %c0_i32_0 : i32, i32, i32
  }
  func.func @transform_1(%arg0: i32) -> (i32, i32, i32) {
    %c0_i32 = arith.constant 0 : i32
    %c0_i32_0 = arith.constant 0 : i32
    %c0_i32_1 = arith.constant 0 : i32
    return %arg0, %c0_i32, %c0_i32_0 : i32, i32, i32
  }
  func.func @transform_2(%arg0: i32) -> (i32, i32, i32) {
    %c0_i32 = arith.constant 0 : i32
    %c0_i32_0 = arith.constant 0 : i32
    %c0_i32_1 = arith.constant 0 : i32
    return %arg0, %c0_i32, %c0_i32_0 : i32, i32, i32
  }
  func.func @transform_3(%arg0: i32) -> (i32, i32) {
    %c0_i32 = arith.constant 0 : i32
    %c0_i32_0 = arith.constant 0 : i32
    %c0_i32_1 = arith.constant 0 : i32
    return %c0_i32, %c0_i32_0 : i32, i32
  }
  func.func @transform_4(%arg0: i32) -> (i32, i32) {
    %c0_i32 = arith.constant 0 : i32
    %c0_i32_0 = arith.constant 0 : i32
    %c0_i32_1 = arith.constant 0 : i32
    return %c0_i32, %c0_i32_0 : i32, i32
  }
  func.func @transform_5(%arg0: i32) -> (i32, i32) {
    %c0_i32 = arith.constant 0 : i32
    %c0_i32_0 = arith.constant 0 : i32
    %c0_i32_1 = arith.constant 0 : i32
    return %c0_i32, %c0_i32_0 : i32, i32
  }
  func.func @transform_6(%arg0: i32) -> (i32, i32) {
    %c0_i32 = arith.constant 0 : i32
    %c0_i32_0 = arith.constant 0 : i32
    %c0_i32_1 = arith.constant 0 : i32
    return %c0_i32, %c0_i32_0 : i32, i32
  }
  func.func @transform_7(%arg0: i32) -> (i32, i32) {
    %c0_i32 = arith.constant 0 : i32
    %c0_i32_0 = arith.constant 0 : i32
    %c0_i32_1 = arith.constant 0 : i32
    return %c0_i32, %c0_i32_0 : i32, i32
  }
  func.func @transform_8(%arg0: i32) -> (i32, i32) {
    %c0_i32 = arith.constant 0 : i32
    %c0_i32_0 = arith.constant 0 : i32
    %c0_i32_1 = arith.constant 0 : i32
    return %c0_i32, %c0_i32_0 : i32, i32
  }
  func.func @transform_9(%arg0: i32) -> (i32, i32) {
    %c0_i32 = arith.constant 0 : i32
    %c0_i32_0 = arith.constant 0 : i32
    %c0_i32_1 = arith.constant 0 : i32
    return %c0_i32, %c0_i32_0 : i32, i32
  }
  func.func @transform_10(%arg0: i32) -> (i32, i32) {
    %c0_i32 = arith.constant 0 : i32
    %c0_i32_0 = arith.constant 0 : i32
    %c0_i32_1 = arith.constant 0 : i32
    return %c0_i32, %c0_i32_0 : i32, i32
  }
  func.func @transform_11(%arg0: i32) -> (i32, i32) {
    %c0_i32 = arith.constant 0 : i32
    %c0_i32_0 = arith.constant 0 : i32
    %c0_i32_1 = arith.constant 0 : i32
    return %c0_i32, %c0_i32_0 : i32, i32
  }
  func.func @transform_12(%arg0: i32) -> (i32, i32) {
    %c0_i32 = arith.constant 0 : i32
    %c0_i32_0 = arith.constant 0 : i32
    %c0_i32_1 = arith.constant 0 : i32
    return %c0_i32, %c0_i32_0 : i32, i32
  }
  func.func @transform_13(%arg0: i32) -> (i32, i32) {
    %c0_i32 = arith.constant 0 : i32
    %c0_i32_0 = arith.constant 0 : i32
    %c0_i32_1 = arith.constant 0 : i32
    return %c0_i32, %c0_i32_0 : i32, i32
  }
  func.func @transform_14(%arg0: i32) -> (i32, i32) {
    %c0_i32 = arith.constant 0 : i32
    %c0_i32_0 = arith.constant 0 : i32
    %c0_i32_1 = arith.constant 0 : i32
    return %c0_i32, %c0_i32_0 : i32, i32
  }
  func.func @transform_15(%arg0: i32) -> (i32, i32) {
    %c0_i32 = arith.constant 0 : i32
    %c0_i32_0 = arith.constant 0 : i32
    %c0_i32_1 = arith.constant 0 : i32
    return %c0_i32, %c0_i32_0 : i32, i32
  }
  func.func @transform_16(%arg0: i32) -> (i32, i32) {
    %c0_i32 = arith.constant 0 : i32
    %c0_i32_0 = arith.constant 0 : i32
    %c0_i32_1 = arith.constant 0 : i32
    return %c0_i32, %c0_i32_0 : i32, i32
  }
  func.func @transform_17(%arg0: i32) -> (i32, i32, i32) {
    %c0_i32 = arith.constant 0 : i32
    %c0_i32_0 = arith.constant 0 : i32
    %c0_i32_1 = arith.constant 0 : i32
    return %arg0, %c0_i32, %c0_i32_0 : i32, i32, i32
  }
}

</mosaic_0001>

<llo_original>
// kernel: gat_layer_and_weight_forward.1
$region0: #{gat_layer_and_weight_forward.1}
  #allocation0 [shape = 'u32[]', space=smem, size = 0x4, offset = 0x4, fixed_abs, tag = 'smem constant byte address 0x4 - core index']
  #allocation1 [shape = 'u32[144,128]{1,0:T(1,128)}', space=vmem, size = 0x12000, scoped, tag = 'internal scratch']
  #allocation2 [shape = 'f32[1,1]{1,0:T(1,128)S(6)}', space=smem, size = 0x200, scoped, tag = 'scoped memory for gat_layer_and_weight_forward.1']
  %s0 = inlined_call_operand.vmem [shape: f32[2,16,8], index: 0, kind: input, shape index: {}]
  %s1 = inlined_call_operand.vmem [shape: f32[2,16,16], index: 1, kind: input, shape index: {}]
  %s2 = inlined_call_operand.vmem [shape: f32[2,4,256], index: 2, kind: input, shape index: {}]
  %s3 = inlined_call_operand.vmem [shape: f32[8,16], index: 3, kind: input, shape index: {}]
  %s4 = inlined_call_operand.vmem [shape: f32[8,16], index: 4, kind: input, shape index: {}]
  %s5 = inlined_call_operand.vmem [shape: f32[8,16], index: 5, kind: input, shape index: {}]
  %s6 = inlined_call_operand.vmem [shape: f32[16,256], index: 6, kind: input, shape index: {}]
  %s7 = inlined_call_operand.vmem [shape: f32[16,256], index: 7, kind: input, shape index: {}]
  %s8 = inlined_call_operand.vmem [shape: f32[16,256], index: 8, kind: input, shape index: {}]
  %s9 = inlined_call_operand.vmem [shape: f32[256,16], index: 9, kind: input, shape index: {}]
  %s10 = inlined_call_operand.vmem [shape: f32[8,4], index: 10, kind: input, shape index: {}]
  %s11 = inlined_call_operand.vmem [shape: f32[8,1], index: 11, kind: input, shape index: {}]
  %s12 = inlined_call_operand.vmem [shape: f32[1,8], index: 12, kind: input, shape index: {}]
  %s13 = inlined_call_operand.vmem [shape: f32[1,8], index: 13, kind: input, shape index: {}]
  %s14 = inlined_call_operand.<no memory space> [shape: f32[1,1], index: 14, kind: input, shape index: {}]
  %s15 = inlined_call_operand.vmem [shape: f32[16,16], index: 15, kind: input, shape index: {}]
  %s16 = inlined_call_operand.vmem [shape: f32[1,16], index: 16, kind: input, shape index: {}]
  %s17 = inlined_call_operand.hbm [shape: f32[2,16,16], index: 17, kind: output, shape index: {}]
  %s18 = sld [smem:[#allocation0]]
  $region101: #{gat_layer_and_weight_forward.1} parent=0
    _
  %s20 = ssub.s32 1, %s18
  %s21 = scalar_select 0, %s20, %s18
  %22 = sst [smem:[#allocation2]] %s14
  $region1: #{gat_layer_and_weight_forward.1} parent=0
    #allocation3 [shape = 'u8[16384]{0}', space=vmem, size = 0x4000, scoped, tag = 'output window, operand 0']
    #allocation4 [shape = 's32[2]{0}', space=sflag, size = 0x8, scoped, tag = 'scoped memory for gat_layer_and_weight_forward.1']
    %23 = vsyncpa [#allocation4], 0
    %s24 = scalar_lea.sflag [#allocation4], 1
    %25 = vsyncpa %s24, 0
    loop: start=0, step=1, limit=4
    $region2: #{gat_layer_and_weight_forward.1} parent=1 // loop_pre_header
      _
    $region3: #{gat_layer_and_weight_forward.1} parent=1 // loop_header
      %s27 = sphi 0, %s31
      %p28 = scmp.ge.s32.totalorder %s27, 4
      %s37 = sphi 0, %s39
      %s40 = sphi 0, %s37
      %s41 = sphi 0, %s40
      %s57 = sphi 0, %s41
      %s63 = sphi 0, %s65
      %s66 = sphi 0, %s63
      %s67 = sphi 0, %s66
      %s83 = sphi 0, %s67
      %s89 = sphi 0, %s91
      %s92 = sphi 0, %s89
      %s93 = sphi 0, %s92
      %s109 = sphi 0, %s93
      %s113 = sphi 0, %s113
      %s115 = sphi 0, %s113
      %s116 = sphi 0, %s115
      %s130 = sphi 0, %s116
      %s134 = sphi 0, %s134
      %s136 = sphi 0, %s134
      %s137 = sphi 0, %s136
      %s151 = sphi 0, %s137
      %s155 = sphi 0, %s155
      %s157 = sphi 0, %s155
      %s158 = sphi 0, %s157
      %s172 = sphi 0, %s158
      %s176 = sphi 0, %s176
      %s178 = sphi 0, %s176
      %s179 = sphi 0, %s178
      %s193 = sphi 0, %s179
      %s197 = sphi 0, %s197
      %s199 = sphi 0, %s197
      %s200 = sphi 0, %s199
      %s214 = sphi 0, %s200
      %s218 = sphi 0, %s218
      %s220 = sphi 0, %s218
      %s221 = sphi 0, %s220
      %s235 = sphi 0, %s221
      %s239 = sphi 0, %s239
      %s241 = sphi 0, %s239
      %s242 = sphi 0, %s241
      %s256 = sphi 0, %s242
      %s260 = sphi 0, %s260
      %s262 = sphi 0, %s260
      %s263 = sphi 0, %s262
      %s277 = sphi 0, %s263
      %s281 = sphi 0, %s281
      %s283 = sphi 0, %s281
      %s284 = sphi 0, %s283
      %s298 = sphi 0, %s284
      %s302 = sphi 0, %s302
      %s304 = sphi 0, %s302
      %s305 = sphi 0, %s304
      %s319 = sphi 0, %s305
      %s323 = sphi 0, %s323
      %s325 = sphi 0, %s323
      %s326 = sphi 0, %s325
      %s340 = sphi 0, %s326
      %s344 = sphi 0, %s344
      %s346 = sphi 0, %s344
      %s347 = sphi 0, %s346
      %s361 = sphi 0, %s347
      %s365 = sphi 0, %s365
      %s367 = sphi 0, %s365
      %s368 = sphi 0, %s367
      %s382 = sphi 0, %s368
      %s386 = sphi 0, %s386
      %s388 = sphi 0, %s386
      %s389 = sphi 0, %s388
      %s403 = sphi 0, %s389
      %s409 = sphi 0, %s411
      %s412 = sphi 0, %s409
      %s413 = sphi 0, %s412
      %s429 = sphi 0, %s413
    $region4: #{gat_layer_and_weight_forward.1} parent=1 // loop_header_branch
      %30 = sbr.rel (%p28) target = $region8
    $region5: #{gat_layer_and_weight_forward.1} parent=1 // loop_body
      %s32 = ssub.s32 %s27, 1
      %s33 = ssub.s32 %s27, 2
      %s34 = sadd.s32 %s27, 1
      %s35 = ssub.s32 %s27, %s34
      %p36 = scmp.eq.s32.totalorder %s35, 0
      %s38 = sadd.s32 %s37, 1
      %s39 = scalar_select %p36, %s37, %s38
      %p42 = pneg %p36
      %p43 = scmp.eq.s32.totalorder %s27, 1
      %p44 = por %p42, %p43
      %p45 = scmp.ne.s32.totalorder %s37, %s40
      %p46 = scmp.eq.s32.totalorder %s27, 0
      %p47 = por %p45, %p46
      %p48 = scmp.ne.s32.totalorder %s37, %s40
      %p49 = scmp.eq.s32.totalorder %s32, 1
      %p50 = por %p48, %p49
      %p51 = scmp.ne.s32.totalorder %s40, %s41
      %p52 = scmp.eq.s32.totalorder %s32, 0
      %p53 = por %p51, %p52
      %p54 = scmp.ne.s32.totalorder %s40, %s41
      %p55 = scmp.eq.s32.totalorder %s33, 1
      %p56 = por %p54, %p55
      %p58 = scmp.ne.s32.totalorder %s41, %s57
      %p59 = scmp.eq.s32.totalorder %s33, 0
      %p60 = por %p58, %p59
      %s61 = ssub.s32 %s27, %s34
      %p62 = scmp.eq.s32.totalorder %s61, 0
      %s64 = sadd.s32 %s63, 1
      %s65 = scalar_select %p62, %s63, %s64
      %p68 = pneg %p62
      %p69 = scmp.eq.s32.totalorder %s27, 1
      %p70 = por %p68, %p69
      %p71 = scmp.ne.s32.totalorder %s63, %s66
      %p72 = scmp.eq.s32.totalorder %s27, 0
      %p73 = por %p71, %p72
      %p74 = scmp.ne.s32.totalorder %s63, %s66
      %p75 = scmp.eq.s32.totalorder %s32, 1
      %p76 = por %p74, %p75
      %p77 = scmp.ne.s32.totalorder %s66, %s67
      %p78 = scmp.eq.s32.totalorder %s32, 0
      %p79 = por %p77, %p78
      %p80 = scmp.ne.s32.totalorder %s66, %s67
      %p81 = scmp.eq.s32.totalorder %s33, 1
      %p82 = por %p80, %p81
      %p84 = scmp.ne.s32.totalorder %s67, %s83
      %p85 = scmp.eq.s32.totalorder %s33, 0
      %p86 = por %p84, %p85
      %s87 = ssub.s32 %s27, %s34
      %p88 = scmp.eq.s32.totalorder %s87, 0
      %s90 = sadd.s32 %s89, 1
      %s91 = scalar_select %p88, %s89, %s90
      %p94 = pneg %p88
      %p95 = scmp.eq.s32.totalorder %s27, 1
      %p96 = por %p94, %p95
      %p97 = scmp.ne.s32.totalorder %s89, %s92
      %p98 = scmp.eq.s32.totalorder %s27, 0
      %p99 = por %p97, %p98
      %p100 = scmp.ne.s32.totalorder %s89, %s92
      %p101 = scmp.eq.s32.totalorder %s32, 1
      %p102 = por %p100, %p101
      %p103 = scmp.ne.s32.totalorder %s92, %s93
      %p104 = scmp.eq.s32.totalorder %s32, 0
      %p105 = por %p103, %p104
      %p106 = scmp.ne.s32.totalorder %s92, %s93
      %p107 = scmp.eq.s32.totalorder %s33, 1
      %p108 = por %p106, %p107
      %p110 = scmp.ne.s32.totalorder %s93, %s109
      %p111 = scmp.eq.s32.totalorder %s33, 0
      %p112 = por %p110, %p111
      %s114 = sadd.s32 %s113, 1
      %p117 = scmp.eq.s32.totalorder %s27, 1
      %p118 = scmp.ne.s32.totalorder %s113, %s115
      %p119 = scmp.eq.s32.totalorder %s27, 0
      %p120 = por %p118, %p119
      %p121 = scmp.ne.s32.totalorder %s113, %s115
      %p122 = scmp.eq.s32.totalorder %s32, 1
      %p123 = por %p121, %p122
      %p124 = scmp.ne.s32.totalorder %s115, %s116
      %p125 = scmp.eq.s32.totalorder %s32, 0
      %p126 = por %p124, %p125
      %p127 = scmp.ne.s32.totalorder %s115, %s116
      %p128 = scmp.eq.s32.totalorder %s33, 1
      %p129 = por %p127, %p128
      %p131 = scmp.ne.s32.totalorder %s116, %s130
      %p132 = scmp.eq.s32.totalorder %s33, 0
      %p133 = por %p131, %p132
      %s135 = sadd.s32 %s134, 1
      %p138 = scmp.eq.s32.totalorder %s27, 1
      %p139 = scmp.ne.s32.totalorder %s134, %s136
      %p140 = scmp.eq.s32.totalorder %s27, 0
      %p141 = por %p139, %p140
      %p142 = scmp.ne.s32.totalorder %s134, %s136
      %p143 = scmp.eq.s32.totalorder %s32, 1
      %p144 = por %p142, %p143
      %p145 = scmp.ne.s32.totalorder %s136, %s137
      %p146 = scmp.eq.s32.totalorder %s32, 0
      %p147 = por %p145, %p146
      %p148 = scmp.ne.s32.totalorder %s136, %s137
      %p149 = scmp.eq.s32.totalorder %s33, 1
      %p150 = por %p148, %p149
      %p152 = scmp.ne.s32.totalorder %s137, %s151
      %p153 = scmp.eq.s32.totalorder %s33, 0
      %p154 = por %p152, %p153
      %s156 = sadd.s32 %s155, 1
      %p159 = scmp.eq.s32.totalorder %s27, 1
      %p160 = scmp.ne.s32.totalorder %s155, %s157
      %p161 = scmp.eq.s32.totalorder %s27, 0
      %p162 = por %p160, %p161
      %p163 = scmp.ne.s32.totalorder %s155, %s157
      %p164 = scmp.eq.s32.totalorder %s32, 1
      %p165 = por %p163, %p164
      %p166 = scmp.ne.s32.totalorder %s157, %s158
      %p167 = scmp.eq.s32.totalorder %s32, 0
      %p168 = por %p166, %p167
      %p169 = scmp.ne.s32.totalorder %s157, %s158
      %p170 = scmp.eq.s32.totalorder %s33, 1
      %p171 = por %p169, %p170
      %p173 = scmp.ne.s32.totalorder %s158, %s172
      %p174 = scmp.eq.s32.totalorder %s33, 0
      %p175 = por %p173, %p174
      %s177 = sadd.s32 %s176, 1
      %p180 = scmp.eq.s32.totalorder %s27, 1
      %p181 = scmp.ne.s32.totalorder %s176, %s178
      %p182 = scmp.eq.s32.totalorder %s27, 0
      %p183 = por %p181, %p182
      %p184 = scmp.ne.s32.totalorder %s176, %s178
      %p185 = scmp.eq.s32.totalorder %s32, 1
      %p186 = por %p184, %p185
      %p187 = scmp.ne.s32.totalorder %s178, %s179
      %p188 = scmp.eq.s32.totalorder %s32, 0
      %p189 = por %p187, %p188
      %p190 = scmp.ne.s32.totalorder %s178, %s179
      %p191 = scmp.eq.s32.totalorder %s33, 1
      %p192 = por %p190, %p191
      %p194 = scmp.ne.s32.totalorder %s179, %s193
      %p195 = scmp.eq.s32.totalorder %s33, 0
      %p196 = por %p194, %p195
      %s198 = sadd.s32 %s197, 1
      %p201 = scmp.eq.s32.totalorder %s27, 1
      %p202 = scmp.ne.s32.totalorder %s197, %s199
      %p203 = scmp.eq.s32.totalorder %s27, 0
      %p204 = por %p202, %p203
      %p205 = scmp.ne.s32.totalorder %s197, %s199
      %p206 = scmp.eq.s32.totalorder %s32, 1
      %p207 = por %p205, %p206
      %p208 = scmp.ne.s32.totalorder %s199, %s200
      %p209 = scmp.eq.s32.totalorder %s32, 0
      %p210 = por %p208, %p209
      %p211 = scmp.ne.s32.totalorder %s199, %s200
      %p212 = scmp.eq.s32.totalorder %s33, 1
      %p213 = por %p211, %p212
      %p215 = scmp.ne.s32.totalorder %s200, %s214
      %p216 = scmp.eq.s32.totalorder %s33, 0
      %p217 = por %p215, %p216
      %s219 = sadd.s32 %s218, 1
      %p222 = scmp.eq.s32.totalorder %s27, 1
      %p223 = scmp.ne.s32.totalorder %s218, %s220
      %p224 = scmp.eq.s32.totalorder %s27, 0
      %p225 = por %p223, %p224
      %p226 = scmp.ne.s32.totalorder %s218, %s220
      %p227 = scmp.eq.s32.totalorder %s32, 1
      %p228 = por %p226, %p227
      %p229 = scmp.ne.s32.totalorder %s220, %s221
      %p230 = scmp.eq.s32.totalorder %s32, 0
      %p231 = por %p229, %p230
      %p232 = scmp.ne.s32.totalorder %s220, %s221
      %p233 = scmp.eq.s32.totalorder %s33, 1
      %p234 = por %p232, %p233
      %p236 = scmp.ne.s32.totalorder %s221, %s235
      %p237 = scmp.eq.s32.totalorder %s33, 0
      %p238 = por %p236, %p237
      %s240 = sadd.s32 %s239, 1
      %p243 = scmp.eq.s32.totalorder %s27, 1
      %p244 = scmp.ne.s32.totalorder %s239, %s241
      %p245 = scmp.eq.s32.totalorder %s27, 0
      %p246 = por %p244, %p245
      %p247 = scmp.ne.s32.totalorder %s239, %s241
      %p248 = scmp.eq.s32.totalorder %s32, 1
      %p249 = por %p247, %p248
      %p250 = scmp.ne.s32.totalorder %s241, %s242
      %p251 = scmp.eq.s32.totalorder %s32, 0
      %p252 = por %p250, %p251
      %p253 = scmp.ne.s32.totalorder %s241, %s242
      %p254 = scmp.eq.s32.totalorder %s33, 1
      %p255 = por %p253, %p254
      %p257 = scmp.ne.s32.totalorder %s242, %s256
      %p258 = scmp.eq.s32.totalorder %s33, 0
      %p259 = por %p257, %p258
      %s261 = sadd.s32 %s260, 1
      %p264 = scmp.eq.s32.totalorder %s27, 1
      %p265 = scmp.ne.s32.totalorder %s260, %s262
      %p266 = scmp.eq.s32.totalorder %s27, 0
      %p267 = por %p265, %p266
      %p268 = scmp.ne.s32.totalorder %s260, %s262
      %p269 = scmp.eq.s32.totalorder %s32, 1
      %p270 = por %p268, %p269
      %p271 = scmp.ne.s32.totalorder %s262, %s263
      %p272 = scmp.eq.s32.totalorder %s32, 0
      %p273 = por %p271, %p272
      %p274 = scmp.ne.s32.totalorder %s262, %s263
      %p275 = scmp.eq.s32.totalorder %s33, 1
      %p276 = por %p274, %p275
      %p278 = scmp.ne.s32.totalorder %s263, %s277
      %p279 = scmp.eq.s32.totalorder %s33, 0
      %p280 = por %p278, %p279
      %s282 = sadd.s32 %s281, 1
      %p285 = scmp.eq.s32.totalorder %s27, 1
      %p286 = scmp.ne.s32.totalorder %s281, %s283
      %p287 = scmp.eq.s32.totalorder %s27, 0
      %p288 = por %p286, %p287
      %p289 = scmp.ne.s32.totalorder %s281, %s283
      %p290 = scmp.eq.s32.totalorder %s32, 1
      %p291 = por %p289, %p290
      %p292 = scmp.ne.s32.totalorder %s283, %s284
      %p293 = scmp.eq.s32.totalorder %s32, 0
      %p294 = por %p292, %p293
      %p295 = scmp.ne.s32.totalorder %s283, %s284
      %p296 = scmp.eq.s32.totalorder %s33, 1
      %p297 = por %p295, %p296
      %p299 = scmp.ne.s32.totalorder %s284, %s298
      %p300 = scmp.eq.s32.totalorder %s33, 0
      %p301 = por %p299, %p300
      %s303 = sadd.s32 %s302, 1
      %p306 = scmp.eq.s32.totalorder %s27, 1
      %p307 = scmp.ne.s32.totalorder %s302, %s304
      %p308 = scmp.eq.s32.totalorder %s27, 0
      %p309 = por %p307, %p308
      %p310 = scmp.ne.s32.totalorder %s302, %s304
      %p311 = scmp.eq.s32.totalorder %s32, 1
      %p312 = por %p310, %p311
      %p313 = scmp.ne.s32.totalorder %s304, %s305
      %p314 = scmp.eq.s32.totalorder %s32, 0
      %p315 = por %p313, %p314
      %p316 = scmp.ne.s32.totalorder %s304, %s305
      %p317 = scmp.eq.s32.totalorder %s33, 1
      %p318 = por %p316, %p317
      %p320 = scmp.ne.s32.totalorder %s305, %s319
      %p321 = scmp.eq.s32.totalorder %s33, 0
      %p322 = por %p320, %p321
      %s324 = sadd.s32 %s323, 1
      %p327 = scmp.eq.s32.totalorder %s27, 1
      %p328 = scmp.ne.s32.totalorder %s323, %s325
      %p329 = scmp.eq.s32.totalorder %s27, 0
      %p330 = por %p328, %p329
      %p331 = scmp.ne.s32.totalorder %s323, %s325
      %p332 = scmp.eq.s32.totalorder %s32, 1
      %p333 = por %p331, %p332
      %p334 = scmp.ne.s32.totalorder %s325, %s326
      %p335 = scmp.eq.s32.totalorder %s32, 0
      %p336 = por %p334, %p335
      %p337 = scmp.ne.s32.totalorder %s325, %s326
      %p338 = scmp.eq.s32.totalorder %s33, 1
      %p339 = por %p337, %p338
      %p341 = scmp.ne.s32.totalorder %s326, %s340
      %p342 = scmp.eq.s32.totalorder %s33, 0
      %p343 = por %p341, %p342
      %s345 = sadd.s32 %s344, 1
      %p348 = scmp.eq.s32.totalorder %s27, 1
      %p349 = scmp.ne.s32.totalorder %s344, %s346
      %p350 = scmp.eq.s32.totalorder %s27, 0
      %p351 = por %p349, %p350
      %p352 = scmp.ne.s32.totalorder %s344, %s346
      %p353 = scmp.eq.s32.totalorder %s32, 1
      %p354 = por %p352, %p353
      %p355 = scmp.ne.s32.totalorder %s346, %s347
      %p356 = scmp.eq.s32.totalorder %s32, 0
      %p357 = por %p355, %p356
      %p358 = scmp.ne.s32.totalorder %s346, %s347
      %p359 = scmp.eq.s32.totalorder %s33, 1
      %p360 = por %p358, %p359
      %p362 = scmp.ne.s32.totalorder %s347, %s361
      %p363 = scmp.eq.s32.totalorder %s33, 0
      %p364 = por %p362, %p363
      %s366 = sadd.s32 %s365, 1
      %p369 = scmp.eq.s32.totalorder %s27, 1
      %p370 = scmp.ne.s32.totalorder %s365, %s367
      %p371 = scmp.eq.s32.totalorder %s27, 0
      %p372 = por %p370, %p371
      %p373 = scmp.ne.s32.totalorder %s365, %s367
      %p374 = scmp.eq.s32.totalorder %s32, 1
      %p375 = por %p373, %p374
      %p376 = scmp.ne.s32.totalorder %s367, %s368
      %p377 = scmp.eq.s32.totalorder %s32, 0
      %p378 = por %p376, %p377
      %p379 = scmp.ne.s32.totalorder %s367, %s368
      %p380 = scmp.eq.s32.totalorder %s33, 1
      %p381 = por %p379, %p380
      %p383 = scmp.ne.s32.totalorder %s368, %s382
      %p384 = scmp.eq.s32.totalorder %s33, 0
      %p385 = por %p383, %p384
      %s387 = sadd.s32 %s386, 1
      %p390 = scmp.eq.s32.totalorder %s27, 1
      %p391 = scmp.ne.s32.totalorder %s386, %s388
      %p392 = scmp.eq.s32.totalorder %s27, 0
      %p393 = por %p391, %p392
      %p394 = scmp.ne.s32.totalorder %s386, %s388
      %p395 = scmp.eq.s32.totalorder %s32, 1
      %p396 = por %p394, %p395
      %p397 = scmp.ne.s32.totalorder %s388, %s389
      %p398 = scmp.eq.s32.totalorder %s32, 0
      %p399 = por %p397, %p398
      %p400 = scmp.ne.s32.totalorder %s388, %s389
      %p401 = scmp.eq.s32.totalorder %s33, 1
      %p402 = por %p400, %p401
      %p404 = scmp.ne.s32.totalorder %s389, %s403
      %p405 = scmp.eq.s32.totalorder %s33, 0
      %p406 = por %p404, %p405
      %s407 = ssub.s32 %s27, %s34
      %p408 = scmp.eq.s32.totalorder %s407, 0
      %s410 = sadd.s32 %s409, 1
      %s411 = scalar_select %p408, %s409, %s410
      %p414 = pneg %p408
      %p415 = scmp.eq.s32.totalorder %s27, 1
      %p416 = por %p414, %p415
      %p417 = scmp.ne.s32.totalorder %s409, %s412
      %p418 = scmp.eq.s32.totalorder %s27, 0
      %p419 = por %p417, %p418
      %p420 = scmp.ne.s32.totalorder %s409, %s412
      %p421 = scmp.eq.s32.totalorder %s32, 1
      %p422 = por %p420, %p421
      %p423 = scmp.ne.s32.totalorder %s412, %s413
      %p424 = scmp.eq.s32.totalorder %s32, 0
      %p425 = por %p423, %p424
      %p426 = scmp.ne.s32.totalorder %s412, %s413
      %p427 = scmp.eq.s32.totalorder %s33, 1
      %p428 = por %p426, %p427
      %p430 = scmp.ne.s32.totalorder %s413, %s429
      %p431 = scmp.eq.s32.totalorder %s33, 0
      %p432 = por %p430, %p431
      %p433 = scmp.le.s32.totalorder 1, %s27
      %p434 = scmp.lt.s32.totalorder %s27, 3
      %p435 = pnand %p433, %p434
      %p436 = pneg %p435
      // Predicated region
      $region9: #{gat_layer_and_weight_forward.1} parent=5 // pred_check
        _
      $region10: #{gat_layer_and_weight_forward.1} parent=5 // pred_check_branch
        %438 = sbr.rel (%p435) target = $region12
      $region11: #{gat_layer_and_weight_forward.1} parent=5 // pred_region
        %s439 = ssub.s32 %s27, 1
        // Predicated region
        $region13: #{gat_layer_and_weight_forward.1} parent=11 // pred_check
          %p440 = pneg %p126
        $region14: #{gat_layer_and_weight_forward.1} parent=11 // pred_check_branch
          %442 = sbr.rel (%p440) target = $region16
        $region15: #{gat_layer_and_weight_forward.1} parent=11 // pred_region
          _
        $region16: #{gat_layer_and_weight_forward.1} parent=11 // pred_fallthru
          _
        // Predicated region
        $region17: #{gat_layer_and_weight_forward.1} parent=11 // pred_check
          %p443 = pneg %p147
        $region18: #{gat_layer_and_weight_forward.1} parent=11 // pred_check_branch
          %445 = sbr.rel (%p443) target = $region20
        $region19: #{gat_layer_and_weight_forward.1} parent=11 // pred_region
          _
        $region20: #{gat_layer_and_weight_forward.1} parent=11 // pred_fallthru
          _
        // Predicated region
        $region21: #{gat_layer_and_weight_forward.1} parent=11 // pred_check
          %p446 = pneg %p168
        $region22: #{gat_layer_and_weight_forward.1} parent=11 // pred_check_branch
          %448 = sbr.rel (%p446) target = $region24
        $region23: #{gat_layer_and_weight_forward.1} parent=11 // pred_region
          _
        $region24: #{gat_layer_and_weight_forward.1} parent=11 // pred_fallthru
          _
        // Predicated region
        $region25: #{gat_layer_and_weight_forward.1} parent=11 // pred_check
          %p449 = pneg %p189
        $region26: #{gat_layer_and_weight_forward.1} parent=11 // pred_check_branch
          %451 = sbr.rel (%p449) target = $region28
        $region27: #{gat_layer_and_weight_forward.1} parent=11 // pred_region
          _
        $region28: #{gat_layer_and_weight_forward.1} parent=11 // pred_fallthru
          _
        // Predicated region
        $region29: #{gat_layer_and_weight_forward.1} parent=11 // pred_check
          %p452 = pneg %p210
        $region30: #{gat_layer_and_weight_forward.1} parent=11 // pred_check_branch
          %454 = sbr.rel (%p452) target = $region32
        $region31: #{gat_layer_and_weight_forward.1} parent=11 // pred_region
          _
        $region32: #{gat_layer_and_weight_forward.1} parent=11 // pred_fallthru
          _
        // Predicated region
        $region33: #{gat_layer_and_weight_forward.1} parent=11 // pred_check
          %p455 = pneg %p231
        $region34: #{gat_layer_and_weight_forward.1} parent=11 // pred_check_branch
          %457 = sbr.rel (%p455) target = $region36
        $region35: #{gat_layer_and_weight_forward.1} parent=11 // pred_region
          _
        $region36: #{gat_layer_and_weight_forward.1} parent=11 // pred_fallthru
          _
        // Predicated region
        $region37: #{gat_layer_and_weight_forward.1} parent=11 // pred_check
          %p458 = pneg %p252
        $region38: #{gat_layer_and_weight_forward.1} parent=11 // pred_check_branch
          %460 = sbr.rel (%p458) target = $region40
        $region39: #{gat_layer_and_weight_forward.1} parent=11 // pred_region
          _
        $region40: #{gat_layer_and_weight_forward.1} parent=11 // pred_fallthru
          _
        // Predicated region
        $region41: #{gat_layer_and_weight_forward.1} parent=11 // pred_check
          %p461 = pneg %p273
        $region42: #{gat_layer_and_weight_forward.1} parent=11 // pred_check_branch
          %463 = sbr.rel (%p461) target = $region44
        $region43: #{gat_layer_and_weight_forward.1} parent=11 // pred_region
          _
        $region44: #{gat_layer_and_weight_forward.1} parent=11 // pred_fallthru
          _
        // Predicated region
        $region45: #{gat_layer_and_weight_forward.1} parent=11 // pred_check
          %p464 = pneg %p294
        $region46: #{gat_layer_and_weight_forward.1} parent=11 // pred_check_branch
          %466 = sbr.rel (%p464) target = $region48
        $region47: #{gat_layer_and_weight_forward.1} parent=11 // pred_region
          _
        $region48: #{gat_layer_and_weight_forward.1} parent=11 // pred_fallthru
          _
        // Predicated region
        $region49: #{gat_layer_and_weight_forward.1} parent=11 // pred_check
          %p467 = pneg %p315
        $region50: #{gat_layer_and_weight_forward.1} parent=11 // pred_check_branch
          %469 = sbr.rel (%p467) target = $region52
        $region51: #{gat_layer_and_weight_forward.1} parent=11 // pred_region
          _
        $region52: #{gat_layer_and_weight_forward.1} parent=11 // pred_fallthru
          _
        // Predicated region
        $region53: #{gat_layer_and_weight_forward.1} parent=11 // pred_check
          %p470 = pneg %p336
        $region54: #{gat_layer_and_weight_forward.1} parent=11 // pred_check_branch
          %472 = sbr.rel (%p470) target = $region56
        $region55: #{gat_layer_and_weight_forward.1} parent=11 // pred_region
          _
        $region56: #{gat_layer_and_weight_forward.1} parent=11 // pred_fallthru
          _
        // Predicated region
        $region57: #{gat_layer_and_weight_forward.1} parent=11 // pred_check
          %p473 = pneg %p357
        $region58: #{gat_layer_and_weight_forward.1} parent=11 // pred_check_branch
          %475 = sbr.rel (%p473) target = $region60
        $region59: #{gat_layer_and_weight_forward.1} parent=11 // pred_region
          _
        $region60: #{gat_layer_and_weight_forward.1} parent=11 // pred_fallthru
          _
        // Predicated region
        $region61: #{gat_layer_and_weight_forward.1} parent=11 // pred_check
          %p476 = pneg %p378
        $region62: #{gat_layer_and_weight_forward.1} parent=11 // pred_check_branch
          %478 = sbr.rel (%p476) target = $region64
        $region63: #{gat_layer_and_weight_forward.1} parent=11 // pred_region
          _
        $region64: #{gat_layer_and_weight_forward.1} parent=11 // pred_fallthru
          _
        // Predicated region
        $region65: #{gat_layer_and_weight_forward.1} parent=11 // pred_check
          %p479 = pneg %p399
        $region66: #{gat_layer_and_weight_forward.1} parent=11 // pred_check_branch
          %481 = sbr.rel (%p479) target = $region68
        $region67: #{gat_layer_and_weight_forward.1} parent=11 // pred_region
          _
        $region68: #{gat_layer_and_weight_forward.1} parent=11 // pred_fallthru
          _
      $region12: #{gat_layer_and_weight_forward.1} parent=5 // pred_fallthru
        _
      %p482 = scmp.lt.s32.totalorder %s27, 2
      // Predicated region
      $region69: #{gat_layer_and_weight_forward.1} parent=5 // pred_check
        %p483 = pneg %p482
      $region70: #{gat_layer_and_weight_forward.1} parent=5 // pred_check_branch
        %485 = sbr.rel (%p483) target = $region72
      $region71: #{gat_layer_and_weight_forward.1} parent=5 // pred_region
        // Predicated region
        $region73: #{gat_layer_and_weight_forward.1} parent=71 // pred_check
          %p486 = pneg %p47
        $region74: #{gat_layer_and_weight_forward.1} parent=71 // pred_check_branch
          %488 = sbr.rel (%p486) target = $region76
        $region75: #{gat_layer_and_weight_forward.1} parent=71 // pred_region
          %p489 = scmp.lt.s32.totalorder %s27, 1
          %s490 = scalar_select %p489, %s27, 1
          %s491 = smul.addr %s490, 2
          %s492 = smul.addr %s491, 8
          %s493 = scalar_lea.vmem %s0, %s492
        $region76: #{gat_layer_and_weight_forward.1} parent=71 // pred_fallthru
          _
        // Predicated region
        $region77: #{gat_layer_and_weight_forward.1} parent=71 // pred_check
          %p494 = pneg %p73
        $region78: #{gat_layer_and_weight_forward.1} parent=71 // pred_check_branch
          %496 = sbr.rel (%p494) target = $region80
        $region79: #{gat_layer_and_weight_forward.1} parent=71 // pred_region
          %p497 = scmp.lt.s32.totalorder %s27, 1
          %s498 = scalar_select %p497, %s27, 1
          %s499 = smul.addr %s498, 2
          %s500 = smul.addr %s499, 8
          %s501 = scalar_lea.vmem %s1, %s500
        $region80: #{gat_layer_and_weight_forward.1} parent=71 // pred_fallthru
          _
        // Predicated region
        $region81: #{gat_layer_and_weight_forward.1} parent=71 // pred_check
          %p502 = pneg %p99
        $region82: #{gat_layer_and_weight_forward.1} parent=71 // pred_check_branch
          %504 = sbr.rel (%p502) target = $region84
        $region83: #{gat_layer_and_weight_forward.1} parent=71 // pred_region
          %p505 = scmp.lt.s32.totalorder %s27, 1
          %s506 = scalar_select %p505, %s27, 1
          %s507 = smul.addr %s506, 2
          %s508 = smul.addr %s507, 4
          %s509 = scalar_lea.vmem %s2, %s508
        $region84: #{gat_layer_and_weight_forward.1} parent=71 // pred_fallthru
          _
      $region72: #{gat_layer_and_weight_forward.1} parent=5 // pred_fallthru
        _
      %p510 = scmp.le.s32.totalorder 1, %s27
      %p511 = scmp.lt.s32.totalorder %s27, 3
      %p512 = pnand %p510, %p511
      %p513 = pneg %p512
      // Predicated region
      $region85: #{gat_layer_and_weight_forward.1} parent=5 // pred_check
        _
      $region86: #{gat_layer_and_weight_forward.1} parent=5 // pred_check_branch
        %515 = sbr.rel (%p512) target = $region88
      $region87: #{gat_layer_and_weight_forward.1} parent=5 // pred_region
        %s516 = ssub.s32 %s27, 1
        %p517 = scmp.lt.s32.totalorder %s32, 1
        %s518 = scalar_select %p517, %s32, 1
        %s519 = smul.addr %s518, 2
        %s520 = smul.addr %s519, 8
        %s521 = scalar_lea.vmem %s0, %s520
        %p522 = pneg %p53
        %p523 = pneg %p50
        %p524 = scmp.lt.s32.totalorder %s32, 1
        %s525 = scalar_select %p524, %s32, 1
        %s526 = smul.addr %s525, 2
        %s527 = smul.addr %s526, 8
        %s528 = scalar_lea.vmem %s1, %s527
        %p529 = pneg %p79
        %p530 = pneg %p76
        %p531 = scmp.lt.s32.totalorder %s32, 1
        %s532 = scalar_select %p531, %s32, 1
        %s533 = smul.addr %s532, 2
        %s534 = smul.addr %s533, 4
        %s535 = scalar_lea.vmem %s2, %s534
        %p536 = pneg %p105
        %p537 = pneg %p102
        %p538 = pneg %p126
        %p539 = pneg %p123
        %p540 = pneg %p147
        %p541 = pneg %p144
        %p542 = pneg %p168
        %p543 = pneg %p165
        %p544 = pneg %p189
        %p545 = pneg %p186
        %p546 = pneg %p210
        %p547 = pneg %p207
        %p548 = pneg %p231
        %p549 = pneg %p228
        %p550 = pneg %p252
        %p551 = pneg %p249
        %p552 = pneg %p273
        %p553 = pneg %p270
        %p554 = pneg %p294
        %p555 = pneg %p291
        %p556 = pneg %p315
        %p557 = pneg %p312
        %p558 = pneg %p336
        %p559 = pneg %p333
        %p560 = pneg %p357
        %p561 = pneg %p354
        %p562 = pneg %p378
        %p563 = pneg %p375
        %p564 = pneg %p399
        %p565 = pneg %p396
        %p566 = pneg %p425
        %p567 = pneg %p422
        %s568 = sand.u32 %s412, 1
        %s569 = scalar_lea.sflag [#allocation4], %s568
        %s570 = sand.u32 %s412, 1
        %s571 = smul.addr %s570, 16
        %s572 = scalar_lea.vmem [#allocation3], %s571
        %p573 = scmp.lt.s32.totalorder %s32, 1
        %s574 = scalar_select %p573, %s32, 1
        %s575 = smul.addr %s574, 2
        %s576 = smul.addr %s575, 8
        %s577 = scalar_lea.vmem %s0, %s576
        %p578 = scmp.lt.s32.totalorder %s32, 1
        %s579 = scalar_select %p578, %s32, 1
        %s580 = smul.addr %s579, 2
        %s581 = smul.addr %s580, 8
        %s582 = scalar_lea.vmem %s1, %s581
        %p583 = scmp.lt.s32.totalorder %s32, 1
        %s584 = scalar_select %p583, %s32, 1
        %s585 = smul.addr %s584, 2
        %s586 = smul.addr %s585, 4
        %s587 = scalar_lea.vmem %s2, %s586
        %v588 = vld [vmem:[%s577] sm:$0xff]
        %v589 = vld [vmem:[%s577 + $0x8] sm:$0xff]
        %v590 = vld [vmem:[%s582] sm:$0xff]
        %v591 = vld [vmem:[%s582 + $0x8] sm:$0xff]
        %v592 = vld [vmem:[%s587] sm:$0xff]
        %v593 = vld [vmem:[%s3] sm:$0xff]
        %vm594 = vcmask 64512
        %v596 = vsel %vm594, %v588, 0
        %v599 = vsel %vm594, %v589, 0
        %601 = vmatprep.subr.mxu0 0.0
        %602 = vmatpush1.msra.mxu0 %v593
        %603 = vmatprep.subr.mxu0 0.0
        %604 = vmatpush1.msra.mxu0 0.0
        %605 = vmatprep.subr.mxu0 0.0
        %606 = vmatpush1.msra.mxu0 0.0
        %607 = vmatprep.subr.mxu0 0.0
        %608 = vmatpush1.msra.mxu0 0.0
        %609 = vmatprep.subr.mxu0 0.0
        %610 = vmatpush1.msra.mxu0 0.0
        %611 = vmatprep.subr.mxu0 0.0
        %612 = vmatpush1.msra.mxu0 0.0
        %613 = vmatprep.subr.mxu0 0.0
        %614 = vmatpush1.msra.mxu0 0.0
        %615 = vmatprep.subr.mxu0 0.0
        %616 = vmatpush1.msra.mxu0 0.0
        %617 = vmatprep.subr.mxu0 0.0
        %618 = vmatpush1.msra.mxu0 0.0
        %619 = vmatprep.subr.mxu0 0.0
        %620 = vmatpush1.msra.mxu0 0.0
        %621 = vmatprep.subr.mxu0 0.0
        %622 = vmatpush1.msra.mxu0 0.0
        %623 = vmatprep.subr.mxu0 0.0
        %624 = vmatpush1.msra.mxu0 0.0
        %625 = vmatprep.subr.mxu0 0.0
        %626 = vmatpush1.msra.mxu0 0.0
        %627 = vmatprep.subr.mxu0 0.0
        %628 = vmatpush1.msra.mxu0 0.0
        %629 = vmatprep.subr.mxu0 0.0
        %630 = vmatpush1.msra.mxu0 0.0
        %631 = vmatprep.subr.mxu0 0.0
        %632 = vmatpush1.msra.mxu0 0.0
        %633 = vmatprep.subr.mxu0 0.0
        %634 = vmatpush1.msra.mxu0 0.0
        %635 = vmatprep.subr.mxu0 0.0
        %636 = vmatpush1.msra.mxu0 0.0
        %637 = vmatprep.subr.mxu0 0.0
        %638 = vmatpush1.msra.mxu0 0.0
        %639 = vmatprep.subr.mxu0 0.0
        %640 = vmatpush1.msra.mxu0 0.0
        %641 = vmatprep.subr.mxu0 0.0
        %642 = vmatpush1.msra.mxu0 0.0
        %643 = vmatprep.subr.mxu0 0.0
        %644 = vmatpush1.msra.mxu0 0.0
        %645 = vmatprep.subr.mxu0 0.0
        %646 = vmatpush1.msra.mxu0 0.0
        %647 = vmatprep.subr.mxu0 0.0
        %648 = vmatpush1.msra.mxu0 0.0
        %649 = vmatprep.subr.mxu0 0.0
        %650 = vmatpush1.msra.mxu0 0.0
        %651 = vmatprep.subr.mxu0 0.0
        %652 = vmatpush1.msra.mxu0 0.0
        %653 = vmatprep.subr.mxu0 0.0
        %654 = vmatpush1.msra.mxu0 0.0
        %655 = vmatprep.subr.mxu0 0.0
        %656 = vmatpush1.msra.mxu0 0.0
        %657 = vmatprep.subr.mxu0 0.0
        %658 = vmatpush1.msra.mxu0 0.0
        %659 = vmatprep.subr.mxu0 0.0
        %660 = vmatpush1.msra.mxu0 0.0
        %661 = vmatprep.subr.mxu0 0.0
        %662 = vmatpush1.msra.mxu0 0.0
        %663 = vmatprep.subr.mxu0 0.0
        %664 = vmatpush1.msra.mxu0 0.0
        %665 = vmatprep.mubr.f32.mxu0 0.0
        %666 = vmatmul.mubr.f32.gmra.mrb[0].mxu0 %v596
        %v667 = vpop.f32.mrb[0].mxu0
        %v668 = vadd.f32 0.0, %v667
        %v669 = vpop.f32.mrb[0].mxu0
        %670 = vmatprep.mubr.f32.mxu0 0.0
        %671 = vmatmul.mubr.f32.gmra.mrb[0].mxu0 %v599
        %v672 = vpop.f32.mrb[0].mxu0
        %v673 = vadd.f32 0.0, %v672
        %v674 = vpop.f32.mrb[0].mxu0
        %675 = vdwg.mxu0
        %v676 = vld [vmem:[%s4] sm:$0xff]
        %vm677 = vcmask 130048
        %v679 = vsel %vm677, %v676, 0
        %v682 = vsel %vm677, %v668, 0
        %v685 = vsel %vm677, %v673, 0
        %687 = vmatprep.subr.mxu0 0.0
        %688 = vmatpush1.xpose.msra.mxu0 %v682
        %689 = vmatprep.subr.mxu0 0.0
        %690 = vmatpush1.xpose.msra.mxu0 %v685
        %691 = vmatprep.subr.mxu0 0.0
        %692 = vmatpush1.xpose.msra.mxu0 0.0
        %693 = vmatprep.subr.mxu0 0.0
        %694 = vmatpush1.xpose.msra.mxu0 0.0
        %695 = vmatprep.subr.mxu0 0.0
        %696 = vmatpush1.xpose.msra.mxu0 0.0
        %697 = vmatprep.subr.mxu0 0.0
        %698 = vmatpush1.xpose.msra.mxu0 0.0
        %699 = vmatprep.subr.mxu0 0.0
        %700 = vmatpush1.xpose.msra.mxu0 0.0
        %701 = vmatprep.subr.mxu0 0.0
        %702 = vmatpush1.xpose.msra.mxu0 0.0
        %703 = vmatprep.subr.mxu0 0.0
        %704 = vmatpush1.xpose.msra.mxu0 0.0
        %705 = vmatprep.subr.mxu0 0.0
        %706 = vmatpush1.xpose.msra.mxu0 0.0
        %707 = vmatprep.subr.mxu0 0.0
        %708 = vmatpush1.xpose.msra.mxu0 0.0
        %709 = vmatprep.subr.mxu0 0.0
        %710 = vmatpush1.xpose.msra.mxu0 0.0
        %711 = vmatprep.subr.mxu0 0.0
        %712 = vmatpush1.xpose.msra.mxu0 0.0
        %713 = vmatprep.subr.mxu0 0.0
        %714 = vmatpush1.xpose.msra.mxu0 0.0
        %715 = vmatprep.subr.mxu0 0.0
        %716 = vmatpush1.xpose.msra.mxu0 0.0
        %717 = vmatprep.subr.mxu0 0.0
        %718 = vmatpush1.xpose.msra.mxu0 0.0
        %719 = vmatprep.subr.mxu0 0.0
        %720 = vmatpush1.xpose.msra.mxu0 0.0
        %721 = vmatprep.subr.mxu0 0.0
        %722 = vmatpush1.xpose.msra.mxu0 0.0
        %723 = vmatprep.subr.mxu0 0.0
        %724 = vmatpush1.xpose.msra.mxu0 0.0
        %725 = vmatprep.subr.mxu0 0.0
        %726 = vmatpush1.xpose.msra.mxu0 0.0
        %727 = vmatprep.subr.mxu0 0.0
        %728 = vmatpush1.xpose.msra.mxu0 0.0
        %729 = vmatprep.subr.mxu0 0.0
        %730 = vmatpush1.xpose.msra.mxu0 0.0
        %731 = vmatprep.subr.mxu0 0.0
        %732 = vmatpush1.xpose.msra.mxu0 0.0
        %733 = vmatprep.subr.mxu0 0.0
        %734 = vmatpush1.xpose.msra.mxu0 0.0
        %735 = vmatprep.subr.mxu0 0.0
        %736 = vmatpush1.xpose.msra.mxu0 0.0
        %737 = vmatprep.subr.mxu0 0.0
        %738 = vmatpush1.xpose.msra.mxu0 0.0
        %739 = vmatprep.subr.mxu0 0.0
        %740 = vmatpush1.xpose.msra.mxu0 0.0
        %741 = vmatprep.subr.mxu0 0.0
        %742 = vmatpush1.xpose.msra.mxu0 0.0
        %743 = vmatprep.subr.mxu0 0.0
        %744 = vmatpush1.xpose.msra.mxu0 0.0
        %745 = vmatprep.subr.mxu0 0.0
        %746 = vmatpush1.xpose.msra.mxu0 0.0
        %747 = vmatprep.subr.mxu0 0.0
        %748 = vmatpush1.xpose.msra.mxu0 0.0
        %749 = vmatprep.subr.mxu0 0.0
        %750 = vmatpush1.xpose.msra.mxu0 0.0
        %751 = vmatprep.mubr.f32.mxu0 0.0
        %752 = vmatmul.mubr.f32.gmra.mrb[0].mxu0 %v679
        %v753 = vpop.f32.mrb[0].mxu0
        %v754 = vadd.f32 0.0, %v753
        %v755 = vpop.f32.mrb[0].mxu0
        %756 = vdwg.mxu0
        %v757 = vld [vmem:[%s5] sm:$0xff]
        %v759 = vsel %vm677, %v757, 0
        %761 = vmatprep.subr.mxu0 0.0
        %762 = vmatpush1.xpose.msra.mxu0 %v682
        %763 = vmatprep.subr.mxu0 0.0
        %764 = vmatpush1.xpose.msra.mxu0 %v685
        %765 = vmatprep.subr.mxu0 0.0
        %766 = vmatpush1.xpose.msra.mxu0 0.0
        %767 = vmatprep.subr.mxu0 0.0
        %768 = vmatpush1.xpose.msra.mxu0 0.0
        %769 = vmatprep.subr.mxu0 0.0
        %770 = vmatpush1.xpose.msra.mxu0 0.0
        %771 = vmatprep.subr.mxu0 0.0
        %772 = vmatpush1.xpose.msra.mxu0 0.0
        %773 = vmatprep.subr.mxu0 0.0
        %774 = vmatpush1.xpose.msra.mxu0 0.0
        %775 = vmatprep.subr.mxu0 0.0
        %776 = vmatpush1.xpose.msra.mxu0 0.0
        %777 = vmatprep.subr.mxu0 0.0
        %778 = vmatpush1.xpose.msra.mxu0 0.0
        %779 = vmatprep.subr.mxu0 0.0
        %780 = vmatpush1.xpose.msra.mxu0 0.0
        %781 = vmatprep.subr.mxu0 0.0
        %782 = vmatpush1.xpose.msra.mxu0 0.0
        %783 = vmatprep.subr.mxu0 0.0
        %784 = vmatpush1.xpose.msra.mxu0 0.0
        %785 = vmatprep.subr.mxu0 0.0
        %786 = vmatpush1.xpose.msra.mxu0 0.0
        %787 = vmatprep.subr.mxu0 0.0
        %788 = vmatpush1.xpose.msra.mxu0 0.0
        %789 = vmatprep.subr.mxu0 0.0
        %790 = vmatpush1.xpose.msra.mxu0 0.0
        %791 = vmatprep.subr.mxu0 0.0
        %792 = vmatpush1.xpose.msra.mxu0 0.0
        %793 = vmatprep.subr.mxu0 0.0
        %794 = vmatpush1.xpose.msra.mxu0 0.0
        %795 = vmatprep.subr.mxu0 0.0
        %796 = vmatpush1.xpose.msra.mxu0 0.0
        %797 = vmatprep.subr.mxu0 0.0
        %798 = vmatpush1.xpose.msra.mxu0 0.0
        %799 = vmatprep.subr.mxu0 0.0
        %800 = vmatpush1.xpose.msra.mxu0 0.0
        %801 = vmatprep.subr.mxu0 0.0
        %802 = vmatpush1.xpose.msra.mxu0 0.0
        %803 = vmatprep.subr.mxu0 0.0
        %804 = vmatpush1.xpose.msra.mxu0 0.0
        %805 = vmatprep.subr.mxu0 0.0
        %806 = vmatpush1.xpose.msra.mxu0 0.0
        %807 = vmatprep.subr.mxu0 0.0
        %808 = vmatpush1.xpose.msra.mxu0 0.0
        %809 = vmatprep.subr.mxu0 0.0
        %810 = vmatpush1.xpose.msra.mxu0 0.0
        %811 = vmatprep.subr.mxu0 0.0
        %812 = vmatpush1.xpose.msra.mxu0 0.0
        %813 = vmatprep.subr.mxu0 0.0
        %814 = vmatpush1.xpose.msra.mxu0 0.0
        %815 = vmatprep.subr.mxu0 0.0
        %816 = vmatpush1.xpose.msra.mxu0 0.0
        %817 = vmatprep.subr.mxu0 0.0
        %818 = vmatpush1.xpose.msra.mxu0 0.0
        %819 = vmatprep.subr.mxu0 0.0
        %820 = vmatpush1.xpose.msra.mxu0 0.0
        %821 = vmatprep.subr.mxu0 0.0
        %822 = vmatpush1.xpose.msra.mxu0 0.0
        %823 = vmatprep.subr.mxu0 0.0
        %824 = vmatpush1.xpose.msra.mxu0 0.0
        %825 = vmatprep.mubr.f32.mxu0 0.0
        %826 = vmatmul.mubr.f32.gmra.mrb[0].mxu0 %v759
        %v827 = vpop.f32.mrb[0].mxu0
        %v828 = vadd.f32 0.0, %v827
        %v829 = vpop.f32.mrb[0].mxu0
        %830 = vdwg.mxu0
        %v831 = vld [vmem:[%s6] sm:$0xff]
        %v832 = vld [vmem:[%s6 + $0x8] sm:$0xff]
        %v833 = vld [vmem:[%s6 + $0x10] sm:$0xff]
        %v834 = vld [vmem:[%s6 + $0x18] sm:$0xff]
        %v835 = vld [vmem:[%s7] sm:$0xff]
        %v836 = vld [vmem:[%s7 + $0x8] sm:$0xff]
        %v837 = vld [vmem:[%s7 + $0x10] sm:$0xff]
        %v838 = vld [vmem:[%s7 + $0x18] sm:$0xff]
        %v840 = vsel %vm677, %v828, 0
        %842 = vmatprep.subr.mxu0 %v836
        %843 = vmatpush1.msra.mxu0 %v835
        %844 = vmatprep.subr.mxu0 %v838
        %845 = vmatpush1.msra.mxu0 %v837
        %846 = vmatprep.subr.mxu0 0.0
        %847 = vmatpush1.msra.mxu0 0.0
        %848 = vmatprep.subr.mxu0 0.0
        %849 = vmatpush1.msra.mxu0 0.0
        %850 = vmatprep.subr.mxu0 0.0
        %851 = vmatpush1.msra.mxu0 0.0
        %852 = vmatprep.subr.mxu0 0.0
        %853 = vmatpush1.msra.mxu0 0.0
        %854 = vmatprep.subr.mxu0 0.0
        %855 = vmatpush1.msra.mxu0 0.0
        %856 = vmatprep.subr.mxu0 0.0
        %857 = vmatpush1.msra.mxu0 0.0
        %858 = vmatprep.subr.mxu0 0.0
        %859 = vmatpush1.msra.mxu0 0.0
        %860 = vmatprep.subr.mxu0 0.0
        %861 = vmatpush1.msra.mxu0 0.0
        %862 = vmatprep.subr.mxu0 0.0
        %863 = vmatpush1.msra.mxu0 0.0
        %864 = vmatprep.subr.mxu0 0.0
        %865 = vmatpush1.msra.mxu0 0.0
        %866 = vmatprep.subr.mxu0 0.0
        %867 = vmatpush1.msra.mxu0 0.0
        %868 = vmatprep.subr.mxu0 0.0
        %869 = vmatpush1.msra.mxu0 0.0
        %870 = vmatprep.subr.mxu0 0.0
        %871 = vmatpush1.msra.mxu0 0.0
        %872 = vmatprep.subr.mxu0 0.0
        %873 = vmatpush1.msra.mxu0 0.0
        %874 = vmatprep.subr.mxu0 0.0
        %875 = vmatpush1.msra.mxu0 0.0
        %876 = vmatprep.subr.mxu0 0.0
        %877 = vmatpush1.msra.mxu0 0.0
        %878 = vmatprep.subr.mxu0 0.0
        %879 = vmatpush1.msra.mxu0 0.0
        %880 = vmatprep.subr.mxu0 0.0
        %881 = vmatpush1.msra.mxu0 0.0
        %882 = vmatprep.subr.mxu0 0.0
        %883 = vmatpush1.msra.mxu0 0.0
        %884 = vmatprep.subr.mxu0 0.0
        %885 = vmatpush1.msra.mxu0 0.0
        %886 = vmatprep.subr.mxu0 0.0
        %887 = vmatpush1.msra.mxu0 0.0
        %888 = vmatprep.subr.mxu0 0.0
        %889 = vmatpush1.msra.mxu0 0.0
        %890 = vmatprep.subr.mxu0 0.0
        %891 = vmatpush1.msra.mxu0 0.0
        %892 = vmatprep.subr.mxu0 0.0
        %893 = vmatpush1.msra.mxu0 0.0
        %894 = vmatprep.subr.mxu0 0.0
        %895 = vmatpush1.msra.mxu0 0.0
        %896 = vmatprep.subr.mxu0 0.0
        %897 = vmatpush1.msra.mxu0 0.0
        %898 = vmatprep.subr.mxu0 0.0
        %899 = vmatpush1.msra.mxu0 0.0
        %900 = vmatprep.subr.mxu0 0.0
        %901 = vmatpush1.msra.mxu0 0.0
        %902 = vmatprep.subr.mxu0 0.0
        %903 = vmatpush1.msra.mxu0 0.0
        %904 = vmatprep.subr.mxu0 0.0
        %905 = vmatpush1.msra.mxu0 0.0
        %906 = vmatprep.mubr.f32.mxu0 0.0
        %907 = vmatmul.mubr.f32.gmra.mrb[0].mxu0 %v840
        %v908 = vpop.f32.mrb[0].mxu0
        %v909 = vadd.f32 0.0, %v908
        %v910 = vpop.f32.mrb[0].mxu0
        %v911 = vadd.f32 0.0, %v910
        %912 = vdwg.mxu0
        %v914 = vsel %vm677, %v754, 0
        %916 = vmatprep.subr.mxu0 %v832
        %917 = vmatpush1.msra.mxu0 %v831
        %918 = vmatprep.subr.mxu0 %v834
        %919 = vmatpush1.msra.mxu0 %v833
        %920 = vmatprep.subr.mxu0 0.0
        %921 = vmatpush1.msra.mxu0 0.0
        %922 = vmatprep.subr.mxu0 0.0
        %923 = vmatpush1.msra.mxu0 0.0
        %924 = vmatprep.subr.mxu0 0.0
        %925 = vmatpush1.msra.mxu0 0.0
        %926 = vmatprep.subr.mxu0 0.0
        %927 = vmatpush1.msra.mxu0 0.0
        %928 = vmatprep.subr.mxu0 0.0
        %929 = vmatpush1.msra.mxu0 0.0
        %930 = vmatprep.subr.mxu0 0.0
        %931 = vmatpush1.msra.mxu0 0.0
        %932 = vmatprep.subr.mxu0 0.0
        %933 = vmatpush1.msra.mxu0 0.0
        %934 = vmatprep.subr.mxu0 0.0
        %935 = vmatpush1.msra.mxu0 0.0
        %936 = vmatprep.subr.mxu0 0.0
        %937 = vmatpush1.msra.mxu0 0.0
        %938 = vmatprep.subr.mxu0 0.0
        %939 = vmatpush1.msra.mxu0 0.0
        %940 = vmatprep.subr.mxu0 0.0
        %941 = vmatpush1.msra.mxu0 0.0
        %942 = vmatprep.subr.mxu0 0.0
        %943 = vmatpush1.msra.mxu0 0.0
        %944 = vmatprep.subr.mxu0 0.0
        %945 = vmatpush1.msra.mxu0 0.0
        %946 = vmatprep.subr.mxu0 0.0
        %947 = vmatpush1.msra.mxu0 0.0
        %948 = vmatprep.subr.mxu0 0.0
        %949 = vmatpush1.msra.mxu0 0.0
        %950 = vmatprep.subr.mxu0 0.0
        %951 = vmatpush1.msra.mxu0 0.0
        %952 = vmatprep.subr.mxu0 0.0
        %953 = vmatpush1.msra.mxu0 0.0
        %954 = vmatprep.subr.mxu0 0.0
        %955 = vmatpush1.msra.mxu0 0.0
        %956 = vmatprep.subr.mxu0 0.0
        %957 = vmatpush1.msra.mxu0 0.0
        %958 = vmatprep.subr.mxu0 0.0
        %959 = vmatpush1.msra.mxu0 0.0
        %960 = vmatprep.subr.mxu0 0.0
        %961 = vmatpush1.msra.mxu0 0.0
        %962 = vmatprep.subr.mxu0 0.0
        %963 = vmatpush1.msra.mxu0 0.0
        %964 = vmatprep.subr.mxu0 0.0
        %965 = vmatpush1.msra.mxu0 0.0
        %966 = vmatprep.subr.mxu0 0.0
        %967 = vmatpush1.msra.mxu0 0.0
        %968 = vmatprep.subr.mxu0 0.0
        %969 = vmatpush1.msra.mxu0 0.0
        %970 = vmatprep.subr.mxu0 0.0
        %971 = vmatpush1.msra.mxu0 0.0
        %972 = vmatprep.subr.mxu0 0.0
        %973 = vmatpush1.msra.mxu0 0.0
        %974 = vmatprep.subr.mxu0 0.0
        %975 = vmatpush1.msra.mxu0 0.0
        %976 = vmatprep.subr.mxu0 0.0
        %977 = vmatpush1.msra.mxu0 0.0
        %978 = vmatprep.subr.mxu0 0.0
        %979 = vmatpush1.msra.mxu0 0.0
        %980 = vmatprep.mubr.f32.mxu0 0.0
        %981 = vmatmul.mubr.f32.gmra.mrb[0].mxu0 %v914
        %v982 = vpop.f32.mrb[0].mxu0
        %v983 = vadd.f32 %v909, %v982
        %v984 = vpop.f32.mrb[0].mxu0
        %v985 = vadd.f32 %v911, %v984
        %986 = vdwg.mxu0
        %v987 = vld [vmem:[%s10] sm:$0xff]
        %v988 = vld [vmem:[%s11] sm:$0xff]
        %990 = vset.pattern.permute.xlu0 0
        %991 = vperm.xlu0 %990, %v987
        %v992 = vpop.permute.xlu0 %991
        %v995 = vlaneseq
        %v996 = vshrl.u32 %v995, 7
        %v997 = vsub.s32 0, %v996
        %v998 = vrot.slane %v592, %v997
        %v999 = vlaneseq
        %v1000 = vshrl.u32 %v999, 7
        %v1001 = vsub.s32 4, %v1000
        %v1002 = vrot.slane %v592, %v1001
        %v1005 = vlaneseq
        %v1006 = vshrl.u32 %v1005, 7
        %v1007 = vsub.s32 0, %v1006
        %v1008 = vrot.slane %v998, %v1007
        %v1009 = vlaneseq
        %v1010 = vshrl.u32 %v1009, 7
        %v1011 = vsub.s32 0, %v1010
        %v1012 = vrot.slane %v1002, %v1011
        %v1013 = vmul.f32 %v992, %v1008
        %v1014 = vmul.f32 %v992, %v1012
        %1016 = vset.pattern.permute.xlu0 0
        %1017 = vperm.xlu0 %1016, %v988
        %v1018 = vpop.permute.xlu0 %1017
        %v1020 = vadd.f32 %v1018, %v1013
        %v1021 = vadd.f32 %v1018, %v1014
        %1022 = vset.pattern.permute.xlu0 1
        %1023 = vperm.xlu0 %1022, %v987
        %v1024 = vpop.permute.xlu0 %1023
        %v1026 = vlaneseq
        %v1027 = vshrl.u32 %v1026, 7
        %v1028 = vsub.s32 1, %v1027
        %v1029 = vrot.slane %v592, %v1028
        %v1030 = vlaneseq
        %v1031 = vshrl.u32 %v1030, 7
        %v1032 = vsub.s32 5, %v1031
        %v1033 = vrot.slane %v592, %v1032
        %v1036 = vlaneseq
        %v1037 = vshrl.u32 %v1036, 7
        %v1038 = vsub.s32 1, %v1037
        %v1039 = vrot.slane %v1029, %v1038
        %v1040 = vlaneseq
        %v1041 = vshrl.u32 %v1040, 7
        %v1042 = vsub.s32 1, %v1041
        %v1043 = vrot.slane %v1033, %v1042
        %v1044 = vmul.f32 %v1024, %v1039
        %v1045 = vmul.f32 %v1024, %v1043
        %v1046 = vadd.f32 %v1020, %v1044
        %v1047 = vadd.f32 %v1021, %v1045
        %1048 = vset.pattern.permute.xlu0 2
        %1049 = vperm.xlu0 %1048, %v987
        %v1050 = vpop.permute.xlu0 %1049
        %v1052 = vlaneseq
        %v1053 = vshrl.u32 %v1052, 7
        %v1054 = vsub.s32 2, %v1053
        %v1055 = vrot.slane %v592, %v1054
        %v1056 = vlaneseq
        %v1057 = vshrl.u32 %v1056, 7
        %v1058 = vsub.s32 6, %v1057
        %v1059 = vrot.slane %v592, %v1058
        %v1062 = vlaneseq
        %v1063 = vshrl.u32 %v1062, 7
        %v1064 = vsub.s32 2, %v1063
        %v1065 = vrot.slane %v1055, %v1064
        %v1066 = vlaneseq
        %v1067 = vshrl.u32 %v1066, 7
        %v1068 = vsub.s32 2, %v1067
        %v1069 = vrot.slane %v1059, %v1068
        %v1070 = vmul.f32 %v1050, %v1065
        %v1071 = vmul.f32 %v1050, %v1069
        %v1072 = vadd.f32 %v1046, %v1070
        %v1073 = vadd.f32 %v1047, %v1071
        %1074 = vset.pattern.permute.xlu0 3
        %1075 = vperm.xlu0 %1074, %v987
        %v1076 = vpop.permute.xlu0 %1075
        %v1078 = vlaneseq
        %v1079 = vshrl.u32 %v1078, 7
        %v1080 = vsub.s32 3, %v1079
        %v1081 = vrot.slane %v592, %v1080
        %v1082 = vlaneseq
        %v1083 = vshrl.u32 %v1082, 7
        %v1084 = vsub.s32 7, %v1083
        %v1085 = vrot.slane %v592, %v1084
        %v1088 = vlaneseq
        %v1089 = vshrl.u32 %v1088, 7
        %v1090 = vsub.s32 3, %v1089
        %v1091 = vrot.slane %v1081, %v1090
        %v1092 = vlaneseq
        %v1093 = vshrl.u32 %v1092, 7
        %v1094 = vsub.s32 3, %v1093
        %v1095 = vrot.slane %v1085, %v1094
        %v1096 = vmul.f32 %v1076, %v1091
        %v1097 = vmul.f32 %v1076, %v1095
        %v1098 = vadd.f32 %v1072, %v1096
        %v1099 = vadd.f32 %v1073, %v1097
        %vm1100 = vcmp.gt.f32.partialorder %v983, 0.0
        %vm1101 = vcmp.gt.f32.partialorder %v985, 0.0
        %v1102 = vmul.f32 %v983, 0.01
        %v1103 = vmul.f32 %v985, 0.01
        %v1104 = vsel %vm1100, %v983, %v1102
        %v1105 = vsel %vm1101, %v985, %v1103
        %vm1106 = vcmp.gt.f32.partialorder %v1098, 0.0
        %vm1107 = vcmp.gt.f32.partialorder %v1099, 0.0
        %v1108 = vmul.f32 %v1098, 0.01
        %v1109 = vmul.f32 %v1099, 0.01
        %v1110 = vsel %vm1106, %v1098, %v1108
        %v1111 = vsel %vm1107, %v1099, %v1109
        %v1112 = vld [vmem:[%s12] sm:$0x1]
        %v1113 = vld [vmem:[%s13] sm:$0x1]
        %v1115 = vsel %vm594, %v1113, 0
        %1117 = vmatprep.subr.mxu0 %v1111
        %1118 = vmatpush1.msra.mxu0 %v1110
        %1119 = vmatprep.subr.mxu0 0.0
        %1120 = vmatpush1.msra.mxu0 0.0
        %1121 = vmatprep.subr.mxu0 0.0
        %1122 = vmatpush1.msra.mxu0 0.0
        %1123 = vmatprep.subr.mxu0 0.0
        %1124 = vmatpush1.msra.mxu0 0.0
        %1125 = vmatprep.subr.mxu0 0.0
        %1126 = vmatpush1.msra.mxu0 0.0
        %1127 = vmatprep.subr.mxu0 0.0
        %1128 = vmatpush1.msra.mxu0 0.0
        %1129 = vmatprep.subr.mxu0 0.0
        %1130 = vmatpush1.msra.mxu0 0.0
        %1131 = vmatprep.subr.mxu0 0.0
        %1132 = vmatpush1.msra.mxu0 0.0
        %1133 = vmatprep.subr.mxu0 0.0
        %1134 = vmatpush1.msra.mxu0 0.0
        %1135 = vmatprep.subr.mxu0 0.0
        %1136 = vmatpush1.msra.mxu0 0.0
        %1137 = vmatprep.subr.mxu0 0.0
        %1138 = vmatpush1.msra.mxu0 0.0
        %1139 = vmatprep.subr.mxu0 0.0
        %1140 = vmatpush1.msra.mxu0 0.0
        %1141 = vmatprep.subr.mxu0 0.0
        %1142 = vmatpush1.msra.mxu0 0.0
        %1143 = vmatprep.subr.mxu0 0.0
        %1144 = vmatpush1.msra.mxu0 0.0
        %1145 = vmatprep.subr.mxu0 0.0
        %1146 = vmatpush1.msra.mxu0 0.0
        %1147 = vmatprep.subr.mxu0 0.0
        %1148 = vmatpush1.msra.mxu0 0.0
        %1149 = vmatprep.subr.mxu0 0.0
        %1150 = vmatpush1.msra.mxu0 0.0
        %1151 = vmatprep.subr.mxu0 0.0
        %1152 = vmatpush1.msra.mxu0 0.0
        %1153 = vmatprep.subr.mxu0 0.0
        %1154 = vmatpush1.msra.mxu0 0.0
        %1155 = vmatprep.subr.mxu0 0.0
        %1156 = vmatpush1.msra.mxu0 0.0
        %1157 = vmatprep.subr.mxu0 0.0
        %1158 = vmatpush1.msra.mxu0 0.0
        %1159 = vmatprep.subr.mxu0 0.0
        %1160 = vmatpush1.msra.mxu0 0.0
        %1161 = vmatprep.subr.mxu0 0.0
        %1162 = vmatpush1.msra.mxu0 0.0
        %1163 = vmatprep.subr.mxu0 0.0
        %1164 = vmatpush1.msra.mxu0 0.0
        %1165 = vmatprep.subr.mxu0 0.0
        %1166 = vmatpush1.msra.mxu0 0.0
        %1167 = vmatprep.subr.mxu0 0.0
        %1168 = vmatpush1.msra.mxu0 0.0
        %1169 = vmatprep.subr.mxu0 0.0
        %1170 = vmatpush1.msra.mxu0 0.0
        %1171 = vmatprep.subr.mxu0 0.0
        %1172 = vmatpush1.msra.mxu0 0.0
        %1173 = vmatprep.subr.mxu0 0.0
        %1174 = vmatpush1.msra.mxu0 0.0
        %1175 = vmatprep.subr.mxu0 0.0
        %1176 = vmatpush1.msra.mxu0 0.0
        %1177 = vmatprep.subr.mxu0 0.0
        %1178 = vmatpush1.msra.mxu0 0.0
        %1179 = vmatprep.subr.mxu0 0.0
        %1180 = vmatpush1.msra.mxu0 0.0
        %1181 = vmatprep.mubr.f32.mxu0 0.0
        %1182 = vmatmul.mubr.f32.gmra.mrb[0].mxu0 %v1115
        %v1183 = vpop.f32.mrb[0].mxu0
        %v1184 = vadd.f32 0.0, %v1183
        %v1185 = vpop.f32.mrb[0].mxu0
        %v1186 = vadd.f32 0.0, %v1185
        %1187 = vdwg.mxu0
        %v1189 = vsel %vm594, %v1112, 0
        %1191 = vmatprep.subr.mxu0 %v1105
        %1192 = vmatpush1.msra.mxu0 %v1104
        %1193 = vmatprep.subr.mxu0 0.0
        %1194 = vmatpush1.msra.mxu0 0.0
        %1195 = vmatprep.subr.mxu0 0.0
        %1196 = vmatpush1.msra.mxu0 0.0
        %1197 = vmatprep.subr.mxu0 0.0
        %1198 = vmatpush1.msra.mxu0 0.0
        %1199 = vmatprep.subr.mxu0 0.0
        %1200 = vmatpush1.msra.mxu0 0.0
        %1201 = vmatprep.subr.mxu0 0.0
        %1202 = vmatpush1.msra.mxu0 0.0
        %1203 = vmatprep.subr.mxu0 0.0
        %1204 = vmatpush1.msra.mxu0 0.0
        %1205 = vmatprep.subr.mxu0 0.0
        %1206 = vmatpush1.msra.mxu0 0.0
        %1207 = vmatprep.subr.mxu0 0.0
        %1208 = vmatpush1.msra.mxu0 0.0
        %1209 = vmatprep.subr.mxu0 0.0
        %1210 = vmatpush1.msra.mxu0 0.0
        %1211 = vmatprep.subr.mxu0 0.0
        %1212 = vmatpush1.msra.mxu0 0.0
        %1213 = vmatprep.subr.mxu0 0.0
        %1214 = vmatpush1.msra.mxu0 0.0
        %1215 = vmatprep.subr.mxu0 0.0
        %1216 = vmatpush1.msra.mxu0 0.0
        %1217 = vmatprep.subr.mxu0 0.0
        %1218 = vmatpush1.msra.mxu0 0.0
        %1219 = vmatprep.subr.mxu0 0.0
        %1220 = vmatpush1.msra.mxu0 0.0
        %1221 = vmatprep.subr.mxu0 0.0
        %1222 = vmatpush1.msra.mxu0 0.0
        %1223 = vmatprep.subr.mxu0 0.0
        %1224 = vmatpush1.msra.mxu0 0.0
        %1225 = vmatprep.subr.mxu0 0.0
        %1226 = vmatpush1.msra.mxu0 0.0
        %1227 = vmatprep.subr.mxu0 0.0
        %1228 = vmatpush1.msra.mxu0 0.0
        %1229 = vmatprep.subr.mxu0 0.0
        %1230 = vmatpush1.msra.mxu0 0.0
        %1231 = vmatprep.subr.mxu0 0.0
        %1232 = vmatpush1.msra.mxu0 0.0
        %1233 = vmatprep.subr.mxu0 0.0
        %1234 = vmatpush1.msra.mxu0 0.0
        %1235 = vmatprep.subr.mxu0 0.0
        %1236 = vmatpush1.msra.mxu0 0.0
        %1237 = vmatprep.subr.mxu0 0.0
        %1238 = vmatpush1.msra.mxu0 0.0
        %1239 = vmatprep.subr.mxu0 0.0
        %1240 = vmatpush1.msra.mxu0 0.0
        %1241 = vmatprep.subr.mxu0 0.0
        %1242 = vmatpush1.msra.mxu0 0.0
        %1243 = vmatprep.subr.mxu0 0.0
        %1244 = vmatpush1.msra.mxu0 0.0
        %1245 = vmatprep.subr.mxu0 0.0
        %1246 = vmatpush1.msra.mxu0 0.0
        %1247 = vmatprep.subr.mxu0 0.0
        %1248 = vmatpush1.msra.mxu0 0.0
        %1249 = vmatprep.subr.mxu0 0.0
        %1250 = vmatpush1.msra.mxu0 0.0
        %1251 = vmatprep.subr.mxu0 0.0
        %1252 = vmatpush1.msra.mxu0 0.0
        %1253 = vmatprep.subr.mxu0 0.0
        %1254 = vmatpush1.msra.mxu0 0.0
        %1255 = vmatprep.mubr.f32.mxu0 0.0
        %1256 = vmatmul.mubr.f32.gmra.mrb[0].mxu0 %v1189
        %v1257 = vpop.f32.mrb[0].mxu0
        %v1258 = vadd.f32 %v1184, %v1257
        %v1259 = vpop.f32.mrb[0].mxu0
        %v1260 = vadd.f32 %v1186, %v1259
        %1261 = vdwg.mxu0
        %s1262 = sld [smem:[#allocation2]]
        %v1263 = vstv %s1262
        %v1264 = vadd.f32 %v1258, %v1263
        %v1265 = vadd.f32 %v1260, %v1263
        %v1266 = vld [vmem:[%s8] sm:$0xff]
        %v1267 = vld [vmem:[%s8 + $0x8] sm:$0xff]
        %v1268 = vld [vmem:[%s8 + $0x10] sm:$0xff]
        %v1269 = vld [vmem:[%s8 + $0x18] sm:$0xff]
        %v1270 = vlaneseq
        %v1271 = vshrl.u32 %v1270, 7
        %v1272 = vsub.s32 0, %v1271
        %v1273 = vrot.slane %v1264, %v1272
        %v1274 = vlaneseq
        %v1275 = vshrl.u32 %v1274, 7
        %v1276 = vsub.s32 0, %v1275
        %v1277 = vrot.slane %v1265, %v1276
        %v1278 = vmul.f32 %v1266, %v1273
        %v1279 = vmul.f32 %v1267, %v1277
        %v1280 = vmul.f32 %v1268, %v1273
        %v1281 = vmul.f32 %v1269, %v1277
        %v1282 = vld [vmem:[%s9] sm:$0xff]
        %v1283 = vld [vmem:[%s9 + $0x8] sm:$0xff]
        %v1284 = vld [vmem:[%s9 + $0x10] sm:$0xff]
        %v1285 = vld [vmem:[%s9 + $0x18] sm:$0xff]
        %v1286 = vld [vmem:[%s9 + $0x20] sm:$0xff]
        %v1287 = vld [vmem:[%s9 + $0x28] sm:$0xff]
        %v1288 = vld [vmem:[%s9 + $0x30] sm:$0xff]
        %v1289 = vld [vmem:[%s9 + $0x38] sm:$0xff]
        %v1290 = vld [vmem:[%s9 + $0x40] sm:$0xff]
        %v1291 = vld [vmem:[%s9 + $0x48] sm:$0xff]
        %v1292 = vld [vmem:[%s9 + $0x50] sm:$0xff]
        %v1293 = vld [vmem:[%s9 + $0x58] sm:$0xff]
        %v1294 = vld [vmem:[%s9 + $0x60] sm:$0xff]
        %v1295 = vld [vmem:[%s9 + $0x68] sm:$0xff]
        %v1296 = vld [vmem:[%s9 + $0x70] sm:$0xff]
        %v1297 = vld [vmem:[%s9 + $0x78] sm:$0xff]
        %v1298 = vld [vmem:[%s9 + $0x80] sm:$0xff]
        %v1299 = vld [vmem:[%s9 + $0x88] sm:$0xff]
        %v1300 = vld [vmem:[%s9 + $0x90] sm:$0xff]
        %v1301 = vld [vmem:[%s9 + $0x98] sm:$0xff]
        %v1302 = vld [vmem:[%s9 + $0xa0] sm:$0xff]
        %v1303 = vld [vmem:[%s9 + $0xa8] sm:$0xff]
        %v1304 = vld [vmem:[%s9 + $0xb0] sm:$0xff]
        %v1305 = vld [vmem:[%s9 + $0xb8] sm:$0xff]
        %v1306 = vld [vmem:[%s9 + $0xc0] sm:$0xff]
        %v1307 = vld [vmem:[%s9 + $0xc8] sm:$0xff]
        %v1308 = vld [vmem:[%s9 + $0xd0] sm:$0xff]
        %v1309 = vld [vmem:[%s9 + $0xd8] sm:$0xff]
        %v1310 = vld [vmem:[%s9 + $0xe0] sm:$0xff]
        %v1311 = vld [vmem:[%s9 + $0xe8] sm:$0xff]
        %v1312 = vld [vmem:[%s9 + $0xf0] sm:$0xff]
        %v1313 = vld [vmem:[%s9 + $0xf8] sm:$0xff]
        %1314 = vmatprep.subr.mxu0 0.0
        %1315 = vmatpush1.msra.mxu0 %v1282
        %1316 = vmatprep.subr.mxu0 0.0
        %1317 = vmatpush1.msra.mxu0 %v1283
        %1318 = vmatprep.subr.mxu0 0.0
        %1319 = vmatpush1.msra.mxu0 %v1284
        %1320 = vmatprep.subr.mxu0 0.0
        %1321 = vmatpush1.msra.mxu0 %v1285
        %1322 = vmatprep.subr.mxu0 0.0
        %1323 = vmatpush1.msra.mxu0 %v1286
        %1324 = vmatprep.subr.mxu0 0.0
        %1325 = vmatpush1.msra.mxu0 %v1287
        %1326 = vmatprep.subr.mxu0 0.0
        %1327 = vmatpush1.msra.mxu0 %v1288
        %1328 = vmatprep.subr.mxu0 0.0
        %1329 = vmatpush1.msra.mxu0 %v1289
        %1330 = vmatprep.subr.mxu0 0.0
        %1331 = vmatpush1.msra.mxu0 %v1290
        %1332 = vmatprep.subr.mxu0 0.0
        %1333 = vmatpush1.msra.mxu0 %v1291
        %1334 = vmatprep.subr.mxu0 0.0
        %1335 = vmatpush1.msra.mxu0 %v1292
        %1336 = vmatprep.subr.mxu0 0.0
        %1337 = vmatpush1.msra.mxu0 %v1293
        %1338 = vmatprep.subr.mxu0 0.0
        %1339 = vmatpush1.msra.mxu0 %v1294
        %1340 = vmatprep.subr.mxu0 0.0
        %1341 = vmatpush1.msra.mxu0 %v1295
        %1342 = vmatprep.subr.mxu0 0.0
        %1343 = vmatpush1.msra.mxu0 %v1296
        %1344 = vmatprep.subr.mxu0 0.0
        %1345 = vmatpush1.msra.mxu0 %v1297
        %1346 = vmatprep.subr.mxu0 0.0
        %1347 = vmatpush1.msra.mxu0 %v1298
        %1348 = vmatprep.subr.mxu0 0.0
        %1349 = vmatpush1.msra.mxu0 %v1299
        %1350 = vmatprep.subr.mxu0 0.0
        %1351 = vmatpush1.msra.mxu0 %v1300
        %1352 = vmatprep.subr.mxu0 0.0
        %1353 = vmatpush1.msra.mxu0 %v1301
        %1354 = vmatprep.subr.mxu0 0.0
        %1355 = vmatpush1.msra.mxu0 %v1302
        %1356 = vmatprep.subr.mxu0 0.0
        %1357 = vmatpush1.msra.mxu0 %v1303
        %1358 = vmatprep.subr.mxu0 0.0
        %1359 = vmatpush1.msra.mxu0 %v1304
        %1360 = vmatprep.subr.mxu0 0.0
        %1361 = vmatpush1.msra.mxu0 %v1305
        %1362 = vmatprep.subr.mxu0 0.0
        %1363 = vmatpush1.msra.mxu0 %v1306
        %1364 = vmatprep.subr.mxu0 0.0
        %1365 = vmatpush1.msra.mxu0 %v1307
        %1366 = vmatprep.subr.mxu0 0.0
        %1367 = vmatpush1.msra.mxu0 %v1308
        %1368 = vmatprep.subr.mxu0 0.0
        %1369 = vmatpush1.msra.mxu0 %v1309
        %1370 = vmatprep.subr.mxu0 0.0
        %1371 = vmatpush1.msra.mxu0 %v1310
        %1372 = vmatprep.subr.mxu0 0.0
        %1373 = vmatpush1.msra.mxu0 %v1311
        %1374 = vmatprep.subr.mxu0 0.0
        %1375 = vmatpush1.msra.mxu0 %v1312
        %1376 = vmatprep.subr.mxu0 0.0
        %1377 = vmatpush1.msra.mxu0 %v1313
        %1378 = vmatprep.mubr.f32.mxu0 %v1279
        %1379 = vmatmul.mubr.f32.gmra.mrb[0].mxu0 %v1278
        %v1380 = vpop.f32.mrb[0].mxu0
        %v1381 = vadd.f32 0.0, %v1380
        %v1382 = vpop.f32.mrb[0].mxu0
        %1383 = vmatprep.mubr.f32.mxu0 %v1281
        %1384 = vmatmul.mubr.f32.gmra.mrb[0].mxu0 %v1280
        %v1385 = vpop.f32.mrb[0].mxu0
        %v1386 = vadd.f32 0.0, %v1385
        %v1387 = vpop.f32.mrb[0].mxu0
        %1388 = vdwg.mxu0
        %vm1389 = vcmp.gt.f32.partialorder %v590, 0.0
        %vm1390 = vcmp.gt.f32.partialorder %v591, 0.0
        %v1391 = vsel %vm1389, %v1381, -9e+15
        %v1392 = vsel %vm1390, %v1386, -9e+15
        %v1393 = vsel %vm677, %v1391, -inf
        %1394 = vmax.xlane.f32.xlu0 %v1393
        %v1395 = vpop.xlane.xlu0 %1394
        %v1396 = vsel %vm677, %v1392, -inf
        %1397 = vmax.xlane.f32.xlu0 %v1396
        %v1398 = vpop.xlane.xlu0 %1397
        %v1399 = vsub.f32 %v1391, %v1395
        %v1400 = vsub.f32 %v1392, %v1398
        %v1401 = vmul.f32 %v1399, 1.442695
        %v1402 = vpow.pop %v1401
        %v1403 = vmul.f32 %v1400, 1.442695
        %v1404 = vpow.pop %v1403
        %v1405 = vsel %vm677, %v1402, 0.0
        %1406 = vadd.xlane.f32.xlu0 %v1405
        %v1407 = vpop.xlane.xlu0 %1406
        %v1408 = vsel %vm677, %v1404, 0.0
        %1409 = vadd.xlane.f32.xlu0 %v1408
        %v1410 = vpop.xlane.xlu0 %1409
        %v1411 = vrcp.pop %v1407
        %v1412 = vrcp.pop %v1410
        %v1413 = vmul.f32 %v1402, %v1411
        %v1414 = vmul.f32 %v1404, %v1412
        %v1416 = vsel %vm677, %v1413, 0
        %v1419 = vsel %vm677, %v1414, 0
        %1421 = vmatprep.subr.mxu0 0.0
        %1422 = vmatpush1.msra.mxu0 %v668
        %1423 = vmatprep.subr.mxu0 0.0
        %1424 = vmatpush1.msra.mxu0 %v673
        %1425 = vmatprep.subr.mxu0 0.0
        %1426 = vmatpush1.msra.mxu0 0.0
        %1427 = vmatprep.subr.mxu0 0.0
        %1428 = vmatpush1.msra.mxu0 0.0
        %1429 = vmatprep.subr.mxu0 0.0
        %1430 = vmatpush1.msra.mxu0 0.0
        %1431 = vmatprep.subr.mxu0 0.0
        %1432 = vmatpush1.msra.mxu0 0.0
        %1433 = vmatprep.subr.mxu0 0.0
        %1434 = vmatpush1.msra.mxu0 0.0
        %1435 = vmatprep.subr.mxu0 0.0
        %1436 = vmatpush1.msra.mxu0 0.0
        %1437 = vmatprep.subr.mxu0 0.0
        %1438 = vmatpush1.msra.mxu0 0.0
        %1439 = vmatprep.subr.mxu0 0.0
        %1440 = vmatpush1.msra.mxu0 0.0
        %1441 = vmatprep.subr.mxu0 0.0
        %1442 = vmatpush1.msra.mxu0 0.0
        %1443 = vmatprep.subr.mxu0 0.0
        %1444 = vmatpush1.msra.mxu0 0.0
        %1445 = vmatprep.subr.mxu0 0.0
        %1446 = vmatpush1.msra.mxu0 0.0
        %1447 = vmatprep.subr.mxu0 0.0
        %1448 = vmatpush1.msra.mxu0 0.0
        %1449 = vmatprep.subr.mxu0 0.0
        %1450 = vmatpush1.msra.mxu0 0.0
        %1451 = vmatprep.subr.mxu0 0.0
        %1452 = vmatpush1.msra.mxu0 0.0
        %1453 = vmatprep.subr.mxu0 0.0
        %1454 = vmatpush1.msra.mxu0 0.0
        %1455 = vmatprep.subr.mxu0 0.0
        %1456 = vmatpush1.msra.mxu0 0.0
        %1457 = vmatprep.subr.mxu0 0.0
        %1458 = vmatpush1.msra.mxu0 0.0
        %1459 = vmatprep.subr.mxu0 0.0
        %1460 = vmatpush1.msra.mxu0 0.0
        %1461 = vmatprep.subr.mxu0 0.0
        %1462 = vmatpush1.msra.mxu0 0.0
        %1463 = vmatprep.subr.mxu0 0.0
        %1464 = vmatpush1.msra.mxu0 0.0
        %1465 = vmatprep.subr.mxu0 0.0
        %1466 = vmatpush1.msra.mxu0 0.0
        %1467 = vmatprep.subr.mxu0 0.0
        %1468 = vmatpush1.msra.mxu0 0.0
        %1469 = vmatprep.subr.mxu0 0.0
        %1470 = vmatpush1.msra.mxu0 0.0
        %1471 = vmatprep.subr.mxu0 0.0
        %1472 = vmatpush1.msra.mxu0 0.0
        %1473 = vmatprep.subr.mxu0 0.0
        %1474 = vmatpush1.msra.mxu0 0.0
        %1475 = vmatprep.subr.mxu0 0.0
        %1476 = vmatpush1.msra.mxu0 0.0
        %1477 = vmatprep.subr.mxu0 0.0
        %1478 = vmatpush1.msra.mxu0 0.0
        %1479 = vmatprep.subr.mxu0 0.0
        %1480 = vmatpush1.msra.mxu0 0.0
        %1481 = vmatprep.subr.mxu0 0.0
        %1482 = vmatpush1.msra.mxu0 0.0
        %1483 = vmatprep.subr.mxu0 0.0
        %1484 = vmatpush1.msra.mxu0 0.0
        %1485 = vmatprep.mubr.f32.mxu0 0.0
        %1486 = vmatmul.mubr.f32.gmra.mrb[0].mxu0 %v1416
        %v1487 = vpop.f32.mrb[0].mxu0
        %v1488 = vadd.f32 0.0, %v1487
        %v1489 = vpop.f32.mrb[0].mxu0
        %1490 = vmatprep.mubr.f32.mxu0 0.0
        %1491 = vmatmul.mubr.f32.gmra.mrb[0].mxu0 %v1419
        %v1492 = vpop.f32.mrb[0].mxu0
        %v1493 = vadd.f32 0.0, %v1492
        %v1494 = vpop.f32.mrb[0].mxu0
        %1495 = vdwg.mxu0
        %v1496 = vld [vmem:[%s15] sm:$0xff]
        %v1497 = vld [vmem:[%s15 + $0x8] sm:$0xff]
        %v1498 = vld [vmem:[%s16] sm:$0x1]
        %v1500 = vlaneseq
        %v1501 = vshrl.u32 %v1500, 7
        %v1502 = vsub.s32 0, %v1501
        %v1503 = vrot.slane %v1498, %v1502
        %v1506 = vsel %vm677, %v1488, 0
        %v1509 = vsel %vm677, %v1493, 0
        %1511 = vmatprep.subr.mxu0 0.0
        %1512 = vmatpush1.msra.mxu0 %v1496
        %1513 = vmatprep.subr.mxu0 0.0
        %1514 = vmatpush1.msra.mxu0 %v1497
        %1515 = vmatprep.subr.mxu0 0.0
        %1516 = vmatpush1.msra.mxu0 0.0
        %1517 = vmatprep.subr.mxu0 0.0
        %1518 = vmatpush1.msra.mxu0 0.0
        %1519 = vmatprep.subr.mxu0 0.0
        %1520 = vmatpush1.msra.mxu0 0.0
        %1521 = vmatprep.subr.mxu0 0.0
        %1522 = vmatpush1.msra.mxu0 0.0
        %1523 = vmatprep.subr.mxu0 0.0
        %1524 = vmatpush1.msra.mxu0 0.0
        %1525 = vmatprep.subr.mxu0 0.0
        %1526 = vmatpush1.msra.mxu0 0.0
        %1527 = vmatprep.subr.mxu0 0.0
        %1528 = vmatpush1.msra.mxu0 0.0
        %1529 = vmatprep.subr.mxu0 0.0
        %1530 = vmatpush1.msra.mxu0 0.0
        %1531 = vmatprep.subr.mxu0 0.0
        %1532 = vmatpush1.msra.mxu0 0.0
        %1533 = vmatprep.subr.mxu0 0.0
        %1534 = vmatpush1.msra.mxu0 0.0
        %1535 = vmatprep.subr.mxu0 0.0
        %1536 = vmatpush1.msra.mxu0 0.0
        %1537 = vmatprep.subr.mxu0 0.0
        %1538 = vmatpush1.msra.mxu0 0.0
        %1539 = vmatprep.subr.mxu0 0.0
        %1540 = vmatpush1.msra.mxu0 0.0
        %1541 = vmatprep.subr.mxu0 0.0
        %1542 = vmatpush1.msra.mxu0 0.0
        %1543 = vmatprep.subr.mxu0 0.0
        %1544 = vmatpush1.msra.mxu0 0.0
        %1545 = vmatprep.subr.mxu0 0.0
        %1546 = vmatpush1.msra.mxu0 0.0
        %1547 = vmatprep.subr.mxu0 0.0
        %1548 = vmatpush1.msra.mxu0 0.0
        %1549 = vmatprep.subr.mxu0 0.0
        %1550 = vmatpush1.msra.mxu0 0.0
        %1551 = vmatprep.subr.mxu0 0.0
        %1552 = vmatpush1.msra.mxu0 0.0
        %1553 = vmatprep.subr.mxu0 0.0
        %1554 = vmatpush1.msra.mxu0 0.0
        %1555 = vmatprep.subr.mxu0 0.0
        %1556 = vmatpush1.msra.mxu0 0.0
        %1557 = vmatprep.subr.mxu0 0.0
        %1558 = vmatpush1.msra.mxu0 0.0
        %1559 = vmatprep.subr.mxu0 0.0
        %1560 = vmatpush1.msra.mxu0 0.0
        %1561 = vmatprep.subr.mxu0 0.0
        %1562 = vmatpush1.msra.mxu0 0.0
        %1563 = vmatprep.subr.mxu0 0.0
        %1564 = vmatpush1.msra.mxu0 0.0
        %1565 = vmatprep.subr.mxu0 0.0
        %1566 = vmatpush1.msra.mxu0 0.0
        %1567 = vmatprep.subr.mxu0 0.0
        %1568 = vmatpush1.msra.mxu0 0.0
        %1569 = vmatprep.subr.mxu0 0.0
        %1570 = vmatpush1.msra.mxu0 0.0
        %1571 = vmatprep.subr.mxu0 0.0
        %1572 = vmatpush1.msra.mxu0 0.0
        %1573 = vmatprep.subr.mxu0 0.0
        %1574 = vmatpush1.msra.mxu0 0.0
        %1575 = vmatprep.mubr.f32.mxu0 0.0
        %1576 = vmatmul.mubr.f32.gmra.mrb[0].mxu0 %v1506
        %v1577 = vpop.f32.mrb[0].mxu0
        %v1578 = vadd.f32 %v1503, %v1577
        %v1579 = vpop.f32.mrb[0].mxu0
        %1580 = vmatprep.mubr.f32.mxu0 0.0
        %1581 = vmatmul.mubr.f32.gmra.mrb[0].mxu0 %v1509
        %v1582 = vpop.f32.mrb[0].mxu0
        %v1583 = vadd.f32 %v1503, %v1582
        %v1584 = vpop.f32.mrb[0].mxu0
        %1585 = vdwg.mxu0
        %vm1586 = vcmp.gt.f32.partialorder %v1578, 0.0
        %vm1587 = vcmp.gt.f32.partialorder %v1583, 0.0
        %v1588 = vmul.f32 %v1578, 1.442695
        %v1589 = vpow.pop %v1588
        %v1590 = vmul.f32 %v1583, 1.442695
        %v1591 = vpow.pop %v1590
        %v1592 = vsub.f32 %v1589, 1.0
        %v1593 = vsub.f32 %v1591, 1.0
        %v1594 = vsel %vm1586, %v1578, %v1592
        %v1595 = vsel %vm1587, %v1583, %v1593
        %1596 = vst.msk [vmem:[%s572] sm:$0xff] %vm677, %v1594
        %1597 = vst.msk [vmem:[%s572 + $0x8] sm:$0xff] %vm677, %v1595
        %s1598 = sand.u32 %s412, 1
        %s1599 = scalar_lea.sflag [#allocation4], %s1598
        %s1600 = sand.u32 %s412, 1
        %s1601 = smul.addr %s1600, 16
        %s1602 = scalar_lea.vmem [#allocation3], %s1601
        // Predicated region
        $region89: #{gat_layer_and_weight_forward.1} parent=87 // pred_check
          %p1603 = pneg %p422
        $region90: #{gat_layer_and_weight_forward.1} parent=87 // pred_check_branch
          %1605 = sbr.rel (%p1603) target = $region92
        $region91: #{gat_layer_and_weight_forward.1} parent=87 // pred_region
          %s1607 = ssub.s32 256, 256
          %1608 = vsyncadd %s1599, %s1607
          %s1609 = smul.addr %s32, 2
          %s1610 = smul.addr %s1609, 128
          %s1611 = scalar_lea.hbm %s17, %s1610
          %s1612 = sshll.u32 %s1602, 4
          %s1613 = int_to_ptr.vmem [resolvable:$true] %s1612
          %1618 = dma.vmem_to_hbm [thread:$0]  %s1613, 256, %s1611, %s1599, 128, 128, 8
        $region92: #{gat_layer_and_weight_forward.1} parent=87 // pred_fallthru
          _
      $region88: #{gat_layer_and_weight_forward.1} parent=5 // pred_fallthru
        _
      %p1619 = scmp.le.s32.totalorder 2, %s27
      // Predicated region
      $region93: #{gat_layer_and_weight_forward.1} parent=5 // pred_check
        %p1620 = pneg %p1619
      $region94: #{gat_layer_and_weight_forward.1} parent=5 // pred_check_branch
        %1622 = sbr.rel (%p1620) target = $region96
      $region95: #{gat_layer_and_weight_forward.1} parent=5 // pred_region
        %s1623 = ssub.s32 %s27, 2
        // Predicated region
        $region97: #{gat_layer_and_weight_forward.1} parent=95 // pred_check
          %p1624 = pneg %p428
        $region98: #{gat_layer_and_weight_forward.1} parent=95 // pred_check_branch
          %1626 = sbr.rel (%p1624) target = $region100
        $region99: #{gat_layer_and_weight_forward.1} parent=95 // pred_region
          %s1627 = sand.u32 %s413, 1
          %s1628 = scalar_lea.sflag [#allocation4], %s1627
          %s1629 = sand.u32 %s413, 1
          %s1630 = smul.addr %s1629, 16
          %s1631 = scalar_lea.vmem [#allocation3], %s1630
          %1632 = dma.done %s1628, 256
        $region100: #{gat_layer_and_weight_forward.1} parent=95 // pred_fallthru
          _
      $region96: #{gat_layer_and_weight_forward.1} parent=5 // pred_fallthru
        _
    $region6: #{gat_layer_and_weight_forward.1} parent=1 // loop_footer
      %s31 = sadd.s32 1, %s27
    $region7: #{gat_layer_and_weight_forward.1} parent=1 // loop_footer_branch
      %26 = sbr.rel target = $region3
    $region8: #{gat_layer_and_weight_forward.1} parent=1 // loop_exit
      _
    %1633 = vsyncpa [#allocation4], 1
    %s1634 = scalar_lea.sflag [#allocation4], 1
    %1635 = vsyncpa %s1634, 1

</llo_original>
